<compile_context>
chip_gen: v7x
topology: tpu7x:2x2x1
jax: 0.10.0
libtpu: 0.0.40
codegen_flags: <defaults>
</compile_context>

<pallas_src>
import functools

import jax
import jax.numpy as jnp
from jax.experimental import pallas as pl
from jax.experimental.pallas import tpu as pltpu


# ----------------------------------------------------------------------------
# QShift (quad-directional spatial token shift) — pure data movement.
# TODO(synk): fold the shift into the kernel via halo-row loads (index_map
# offset by +-W rows) to avoid one full HBM read+write of the activations.
# ----------------------------------------------------------------------------
def q_shift(x, resolution, shift_pixel=1, gamma=0.25):
    B, N, C = x.shape
    H, W = resolution
    assert N == H * W
    g = int(C * gamma)
    x4 = x.reshape(B, H, W, C)
    out = jnp.zeros_like(x4)
    # group 0: shift right along W
    out = out.at[:, :, shift_pixel:, 0:g].set(x4[:, :, :W - shift_pixel, 0:g])
    # group 1: shift left along W
    out = out.at[:, :, :W - shift_pixel, g:2 * g].set(x4[:, :, shift_pixel:, g:2 * g])
    # group 2: shift down along H
    out = out.at[:, shift_pixel:, :, 2 * g:3 * g].set(x4[:, :H - shift_pixel, :, 2 * g:3 * g])
    # group 3: shift up along H
    out = out.at[:, :H - shift_pixel, :, 3 * g:4 * g].set(x4[:, shift_pixel:, :, 3 * g:4 * g])
    # group 4: identity
    out = out.at[:, :, :, 4 * g:].set(x4[:, :, :, 4 * g:])
    return out.reshape(B, N, C)


# ----------------------------------------------------------------------------
# Pallas kernel: per row-tile of shifted tokens (all three matmuls + gating)
#   k  = square(relu(x @ Wk^T))      (optional LayerNorm over hidden dim)
#   kv = k @ Wv^T
#   o  = sigmoid(x @ Wr^T) * kv
# ----------------------------------------------------------------------------
def _channel_mix_kernel(x_ref, wk_ref, wr_ref, wv_ref, lnw_ref, lnb_ref, o_ref,
                        *, key_norm, eps):
    x = x_ref[...]                                        # bf16 MXU operand

    k = jnp.dot(x, wk_ref[...], preferred_element_type=jnp.float32)
    k = jnp.square(jnp.maximum(k, 0.0))                   # f32 elementwise

    if key_norm:
        # One-pass LayerNorm stats: var = E[k^2] - E[k]^2 (single XLU sweep).
        mean = jnp.mean(k, axis=-1, keepdims=True)
        mean2 = jnp.mean(k * k, axis=-1, keepdims=True)
        var = jnp.maximum(mean2 - mean * mean, 0.0)
        k = (k - mean) * jax.lax.rsqrt(var + eps)
        k = k * lnw_ref[...] + lnb_ref[...]

    # Second matmul also on the bf16 MXU path (f32 accumulation).
    kv = jnp.dot(k.astype(wv_ref.dtype), wv_ref[...],
                 preferred_element_type=jnp.float32)
    r = jax.nn.sigmoid(jnp.dot(x, wr_ref[...],
                               preferred_element_type=jnp.float32))
    o_ref[...] = (r * kv).astype(o_ref.dtype)


# ----------------------------------------------------------------------------
# Wrapper
# ----------------------------------------------------------------------------
def _round_up(x, m):
    return ((x + m - 1) // m) * m


def _vmem_need_bytes(tm, C, hidden, out_itemsize, weight_buffers):
    w = weight_buffers * 2 * (C * hidden + C * C + hidden * C)   # bf16 weights
    io = 2 * tm * C * 2 + 2 * tm * C * out_itemsize              # x / o tiles (double-buffered)
    interm = tm * hidden * (4 + 2) + 2 * tm * C * 4              # k (f32+bf16), r, kv
    ln = 4 * hidden * 4
    return w + io + interm + ln


def prepare_params(params, compute_dtype=jnp.bfloat16):
    """One-time prep (outside the per-step path): transpose + cast weights."""
    hidden = params["key"].shape[0]
    ln_w = params.get("ln_w", jnp.ones((hidden,), jnp.float32))
    ln_b = params.get("ln_b", jnp.zeros((hidden,), jnp.float32))
    return {
        "wkT": params["key"].T.astype(compute_dtype),         # (C, hidden)
        "wrT": params["receptance"].T.astype(compute_dtype),  # (C, C)
        "wvT": params["value"].T.astype(compute_dtype),       # (hidden, C)
        "ln_w": ln_w.reshape(1, hidden).astype(jnp.float32),
        "ln_b": ln_b.reshape(1, hidden).astype(jnp.float32),
    }


def vrwkv_channel_mix(x, resolution, prep, *, key_norm=False, tm=512):
    """Forward pass of VRWKV_ChannelMix. x: (B, N, C), resolution = (H, W)."""
    B, N, C = x.shape
    wkT, wrT, wvT = prep["wkT"], prep["wrT"], prep["wvT"]
    hidden = wkT.shape[1]
    ln_w, ln_b = prep["ln_w"], prep["ln_b"]
    out_itemsize = jnp.dtype(x.dtype).itemsize

    xs = q_shift(x, resolution)
    x2 = xs.reshape(B * N, C).astype(wkT.dtype)   # bf16 tokens for the MXU
    M = B * N

    # Row tile: multiple of 8, no larger than (rounded-up) M.  Shrink until the
    # weight-resident footprint fits a conservative budget (covers v7x 64 MiB).
    tm = max(8, (min(int(tm), _round_up(M, 8)) // 8) * 8)
    budget = 48 << 20
    while tm > 8 and _vmem_need_bytes(tm, C, hidden, out_itemsize, 1) > budget:
        tm = max(8, ((tm // 2) // 8) * 8)

    grid = (pl.cdiv(M, tm),)   # ragged last tile handled by masked block writes
    kernel = functools.partial(_channel_mix_kernel, key_norm=key_norm, eps=1e-5)

    def make_in_specs(single_buffer):
        pm = {"pipeline_mode": pl.Buffered(1)} if single_buffer else {}
        return [
            pl.BlockSpec((tm, C), lambda i: (i, 0)),            # shifted tokens
            pl.BlockSpec((C, hidden), lambda i: (0, 0), **pm),  # Wk^T (resident)
            pl.BlockSpec((C, C), lambda i: (0, 0), **pm),       # Wr^T (resident)
            pl.BlockSpec((hidden, C), lambda i: (0, 0), **pm),  # Wv^T (resident)
            pl.BlockSpec((1, hidden), lambda i: (0, 0), **pm),  # LN gamma
            pl.BlockSpec((1, hidden), lambda i: (0, 0), **pm),  # LN beta
        ]

    out = None
    # Prefer single-buffered resident weights (constant index_map); fall back
    # to default double-buffering if this jax build rejects pl.Buffered(1).
    for single_buffer in (True, False):
        w_buffers = 1 if single_buffer else 2
        need = _vmem_need_bytes(tm, C, hidden, out_itemsize, w_buffers)
        vmem_limit = min(max(int(need * 1.5) + (2 << 20), 32 << 20), 64 << 20)
        try:
            out = pl.pallas_call(
                kernel,
                out_shape=jax.ShapeDtypeStruct((M, C), x.dtype),
                grid_spec=pltpu.PrefetchScalarGridSpec(
                    num_scalar_prefetch=0,
                    grid=grid,
                    in_specs=make_in_specs(single_buffer),
                    out_specs=pl.BlockSpec((tm, C), lambda i: (i, 0)),
                ),
                compiler_params=pltpu.CompilerParams(
                    dimension_semantics=("parallel",),
                    vmem_limit_bytes=vmem_limit),
            )(x2, wkT, wrT, wvT, ln_w, ln_b)
            break
        except Exception:
            if not single_buffer:
                raise
    return out.reshape(B, N, C)


# ----------------------------------------------------------------------------
# Pure-JAX f32 reference (mirrors the PyTorch forward) for the correctness check.
# ----------------------------------------------------------------------------
def reference(x, resolution, params, *, key_norm=False):
    xs = q_shift(x, resolution)
    k = xs @ params["key"].T
    k = jnp.square(jnp.maximum(k, 0.0))
    if key_norm:
        mean = k.mean(-1, keepdims=True)
        var = ((k - mean) ** 2).mean(-1, keepdims=True)
        k = (k - mean) / jnp.sqrt(var + 1e-5)
        k = k * params["ln_w"] + params["ln_b"]
    kv = k @ params["value"].T
    r = jax.nn.sigmoid(xs @ params["receptance"].T)
    return r * kv


if __name__ == "__main__":
    # Module config: n_embd=128, hidden_rate=4 -> hidden_sz=512 (lane-dense C).
    B, H, W = 2, 8, 8
    n_embd = 128
    hidden = 4 * n_embd
    N = H * W

    key = jax.random.PRNGKey(0)
    k_x, k_k, k_r, k_v, k_g, k_b = jax.random.split(key, 6)

    x = jax.random.normal(k_x, (B, N, n_embd), dtype=jnp.float32)

    # nn.Linear-style init: U(-1/sqrt(fan_in), 1/sqrt(fan_in))
    def lin_init(k, out_f, in_f):
        bound = 1.0 / (in_f ** 0.5)
        return jax.random.uniform(k, (out_f, in_f), jnp.float32, -bound, bound)

    params = {
        "key": lin_init(k_k, hidden, n_embd),         # (hidden, n_embd)
        "receptance": lin_init(k_r, n_embd, n_embd),  # (n_embd, n_embd)
        "value": lin_init(k_v, n_embd, hidden),       # (n_embd, hidden)
        "ln_w": 1.0 + 0.1 * jax.random.normal(k_g, (hidden,), jnp.float32),
        "ln_b": 0.1 * jax.random.normal(k_b, (hidden,), jnp.float32),
    }

    prep = prepare_params(params)   # transpose + bf16 cast, done once

    for key_norm in (False, True):
        out = vrwkv_channel_mix(x, (H, W), prep, key_norm=key_norm)
        out = jax.block_until_ready(out)
        ref = reference(x, (H, W), params, key_norm=key_norm)
        assert out.shape == (B, N, n_embd)
        # bf16 MXU operands with f32 accumulation -> relaxed tolerance.
        assert jnp.allclose(out, ref, atol=3e-2, rtol=3e-2), \
            f"mismatch vs reference (key_norm={key_norm})"

    print("KERNEL_OK")
</pallas_src>

<mosaic_0001>
module attributes {stable_mosaic.version = 11 : i64} {
  func.func @_channel_mix_kernel(%arg0: i32, %arg1: memref<128x128xbf16, #tpu.memory_space<vmem>>, %arg2: memref<128x512xbf16, #tpu.memory_space<vmem>>, %arg3: memref<128x128xbf16, #tpu.memory_space<vmem>>, %arg4: memref<512x128xbf16, #tpu.memory_space<vmem>>, %arg5: memref<1x512xf32, #tpu.memory_space<vmem>>, %arg6: memref<1x512xf32, #tpu.memory_space<vmem>>, %arg7: memref<128x128xf32, #tpu.memory_space<vmem>>) attributes {dimension_semantics = [#tpu.dimension_semantics<parallel>], iteration_bounds = array<i64: 1>, scalar_prefetch = 0 : i64, scratch_operands = 0 : i64, tpu.core_type = #tpu.core_type<tc>, window_params = [{transform_indices = @transform_0, window_bounds = array<i64: 128, 128>}, {pipeline_mode = #tpu.pipeline_mode<synchronous>, transform_indices = @transform_1, window_bounds = array<i64: 128, 512>}, {pipeline_mode = #tpu.pipeline_mode<synchronous>, transform_indices = @transform_2, window_bounds = array<i64: 128, 128>}, {pipeline_mode = #tpu.pipeline_mode<synchronous>, transform_indices = @transform_3, window_bounds = array<i64: 512, 128>}, {pipeline_mode = #tpu.pipeline_mode<synchronous>, transform_indices = @transform_4, window_bounds = array<i64: 1, 512>}, {pipeline_mode = #tpu.pipeline_mode<synchronous>, transform_indices = @transform_5, window_bounds = array<i64: 1, 512>}, {transform_indices = @transform_6, window_bounds = array<i64: 128, 128>}]} {
    %c0 = arith.constant 0 : index
    %c0_0 = arith.constant 0 : index
    %0 = vector.load %arg1[%c0, %c0_0] : memref<128x128xbf16, #tpu.memory_space<vmem>>, vector<128x128xbf16>
    %c0_1 = arith.constant 0 : index
    %c0_2 = arith.constant 0 : index
    %1 = vector.load %arg2[%c0_1, %c0_2] : memref<128x512xbf16, #tpu.memory_space<vmem>>, vector<128x512xbf16>
    %cst = arith.constant dense<0.000000e+00> : vector<128x512xf32>
    %2 = tpu.matmul %0, %1, %cst {dimension_numbers = #tpu.dot_dimension_numbers<[1], [0], [0], [1], [0, 0, 1, 1], [], []>} : vector<128x128xbf16>, vector<128x512xbf16>, vector<128x512xf32> -> vector<128x512xf32>
    %cst_3 = arith.constant 0.000000e+00 : f32
    %3 = vector.broadcast %cst_3 : f32 to vector<128x512xf32>
    %4 = arith.maximumf %2, %3 : vector<128x512xf32>
    %5 = arith.mulf %4, %4 : vector<128x512xf32>
    %6 = arith.truncf %5 : vector<128x512xf32> to vector<128x512xbf16>
    %c0_4 = arith.constant 0 : index
    %c0_5 = arith.constant 0 : index
    %7 = vector.load %arg4[%c0_4, %c0_5] : memref<512x128xbf16, #tpu.memory_space<vmem>>, vector<512x128xbf16>
    %cst_6 = arith.constant dense<0.000000e+00> : vector<128x128xf32>
    %8 = tpu.matmul %6, %7, %cst_6 {dimension_numbers = #tpu.dot_dimension_numbers<[1], [0], [0], [1], [0, 0, 1, 1], [], []>} : vector<128x512xbf16>, vector<512x128xbf16>, vector<128x128xf32> -> vector<128x128xf32>
    %c0_7 = arith.constant 0 : index
    %c0_8 = arith.constant 0 : index
    %9 = vector.load %arg3[%c0_7, %c0_8] : memref<128x128xbf16, #tpu.memory_space<vmem>>, vector<128x128xbf16>
    %cst_9 = arith.constant dense<0.000000e+00> : vector<128x128xf32>
    %10 = tpu.matmul %0, %9, %cst_9 {dimension_numbers = #tpu.dot_dimension_numbers<[1], [0], [0], [1], [0, 0, 1, 1], [], []>} : vector<128x128xbf16>, vector<128x128xbf16>, vector<128x128xf32> -> vector<128x128xf32>
    %11 = arith.negf %10 : vector<128x128xf32>
    %12 = math.exp %11 : vector<128x128xf32>
    %cst_10 = arith.constant 1.000000e+00 : f32
    %13 = vector.broadcast %cst_10 : f32 to vector<128x128xf32>
    %14 = arith.addf %13, %12 : vector<128x128xf32>
    %15 = arith.divf %13, %14 : vector<128x128xf32>
    %16 = arith.mulf %15, %8 : vector<128x128xf32>
    %c0_11 = arith.constant 0 : index
    %c0_12 = arith.constant 0 : index
    %17 = vector.load %arg7[%c0_11, %c0_12] : memref<128x128xf32, #tpu.memory_space<vmem>>, vector<128x128xf32>
    tpu.vector_store %arg7[%c0_11, %c0_12], %16 {strides = array<i32>} : memref<128x128xf32, #tpu.memory_space<vmem>>, vector<128x128xf32>,
    return
  }
  func.func @transform_0(%arg0: i32) -> (i32, i32) {
    %c0_i32 = arith.constant 0 : i32
    %c0_i32_0 = arith.constant 0 : i32
    return %arg0, %c0_i32 : i32, i32
  }
  func.func @transform_1(%arg0: i32) -> (i32, i32) {
    %c0_i32 = arith.constant 0 : i32
    %c0_i32_0 = arith.constant 0 : i32
    %c0_i32_1 = arith.constant 0 : i32
    return %c0_i32, %c0_i32_0 : i32, i32
  }
  func.func @transform_2(%arg0: i32) -> (i32, i32) {
    %c0_i32 = arith.constant 0 : i32
    %c0_i32_0 = arith.constant 0 : i32
    %c0_i32_1 = arith.constant 0 : i32
    return %c0_i32, %c0_i32_0 : i32, i32
  }
  func.func @transform_3(%arg0: i32) -> (i32, i32) {
    %c0_i32 = arith.constant 0 : i32
    %c0_i32_0 = arith.constant 0 : i32
    %c0_i32_1 = arith.constant 0 : i32
    return %c0_i32, %c0_i32_0 : i32, i32
  }
  func.func @transform_4(%arg0: i32) -> (i32, i32) {
    %c0_i32 = arith.constant 0 : i32
    %c0_i32_0 = arith.constant 0 : i32
    %c0_i32_1 = arith.constant 0 : i32
    return %c0_i32, %c0_i32_0 : i32, i32
  }
  func.func @transform_5(%arg0: i32) -> (i32, i32) {
    %c0_i32 = arith.constant 0 : i32
    %c0_i32_0 = arith.constant 0 : i32
    %c0_i32_1 = arith.constant 0 : i32
    return %c0_i32, %c0_i32_0 : i32, i32
  }
  func.func @transform_6(%arg0: i32) -> (i32, i32) {
    %c0_i32 = arith.constant 0 : i32
    %c0_i32_0 = arith.constant 0 : i32
    return %arg0, %c0_i32 : i32, i32
  }
}

module attributes {stable_mosaic.version = 11 : i64} {
  func.func @_channel_mix_kernel(%arg0: i32, %arg1: memref<128x128xbf16, #tpu.memory_space<vmem>>, %arg2: memref<128x512xbf16, #tpu.memory_space<vmem>>, %arg3: memref<128x128xbf16, #tpu.memory_space<vmem>>, %arg4: memref<512x128xbf16, #tpu.memory_space<vmem>>, %arg5: memref<1x512xf32, #tpu.memory_space<vmem>>, %arg6: memref<1x512xf32, #tpu.memory_space<vmem>>, %arg7: memref<128x128xf32, #tpu.memory_space<vmem>>) attributes {dimension_semantics = [#tpu.dimension_semantics<parallel>], iteration_bounds = array<i64: 1>, scalar_prefetch = 0 : i64, scratch_operands = 0 : i64, tpu.core_type = #tpu.core_type<tc>, window_params = [{transform_indices = @transform_0, window_bounds = array<i64: 128, 128>}, {pipeline_mode = #tpu.pipeline_mode<synchronous>, transform_indices = @transform_1, window_bounds = array<i64: 128, 512>}, {pipeline_mode = #tpu.pipeline_mode<synchronous>, transform_indices = @transform_2, window_bounds = array<i64: 128, 128>}, {pipeline_mode = #tpu.pipeline_mode<synchronous>, transform_indices = @transform_3, window_bounds = array<i64: 512, 128>}, {pipeline_mode = #tpu.pipeline_mode<synchronous>, transform_indices = @transform_4, window_bounds = array<i64: 1, 512>}, {pipeline_mode = #tpu.pipeline_mode<synchronous>, transform_indices = @transform_5, window_bounds = array<i64: 1, 512>}, {transform_indices = @transform_6, window_bounds = array<i64: 128, 128>}]} {
    %c0 = arith.constant 0 : index
    %c0_0 = arith.constant 0 : index
    %0 = vector.load %arg1[%c0, %c0_0] : memref<128x128xbf16, #tpu.memory_space<vmem>>, vector<128x128xbf16>
    %c0_1 = arith.constant 0 : index
    %c0_2 = arith.constant 0 : index
    %1 = vector.load %arg2[%c0_1, %c0_2] : memref<128x512xbf16, #tpu.memory_space<vmem>>, vector<128x512xbf16>
    %cst = arith.constant dense<0.000000e+00> : vector<128x512xf32>
    %2 = tpu.matmul %0, %1, %cst {dimension_numbers = #tpu.dot_dimension_numbers<[1], [0], [0], [1], [0, 0, 1, 1], [], []>} : vector<128x128xbf16>, vector<128x512xbf16>, vector<128x512xf32> -> vector<128x512xf32>
    %cst_3 = arith.constant 0.000000e+00 : f32
    %3 = vector.broadcast %cst_3 : f32 to vector<128x512xf32>
    %4 = arith.maximumf %2, %3 : vector<128x512xf32>
    %5 = arith.mulf %4, %4 : vector<128x512xf32>
    %6 = arith.truncf %5 : vector<128x512xf32> to vector<128x512xbf16>
    %c0_4 = arith.constant 0 : index
    %c0_5 = arith.constant 0 : index
    %7 = vector.load %arg4[%c0_4, %c0_5] : memref<512x128xbf16, #tpu.memory_space<vmem>>, vector<512x128xbf16>
    %cst_6 = arith.constant dense<0.000000e+00> : vector<128x128xf32>
    %8 = tpu.matmul %6, %7, %cst_6 {dimension_numbers = #tpu.dot_dimension_numbers<[1], [0], [0], [1], [0, 0, 1, 1], [], []>} : vector<128x512xbf16>, vector<512x128xbf16>, vector<128x128xf32> -> vector<128x128xf32>
    %c0_7 = arith.constant 0 : index
    %c0_8 = arith.constant 0 : index
    %9 = vector.load %arg3[%c0_7, %c0_8] : memref<128x128xbf16, #tpu.memory_space<vmem>>, vector<128x128xbf16>
    %cst_9 = arith.constant dense<0.000000e+00> : vector<128x128xf32>
    %10 = tpu.matmul %0, %9, %cst_9 {dimension_numbers = #tpu.dot_dimension_numbers<[1], [0], [0], [1], [0, 0, 1, 1], [], []>} : vector<128x128xbf16>, vector<128x128xbf16>, vector<128x128xf32> -> vector<128x128xf32>
    %11 = arith.negf %10 : vector<128x128xf32>
    %12 = math.exp %11 : vector<128x128xf32>
    %cst_10 = arith.constant 1.000000e+00 : f32
    %13 = vector.broadcast %cst_10 : f32 to vector<128x128xf32>
    %14 = arith.addf %13, %12 : vector<128x128xf32>
    %15 = arith.divf %13, %14 : vector<128x128xf32>
    %16 = arith.mulf %15, %8 : vector<128x128xf32>
    %c0_11 = arith.constant 0 : index
    %c0_12 = arith.constant 0 : index
    %17 = vector.load %arg7[%c0_11, %c0_12] : memref<128x128xf32, #tpu.memory_space<vmem>>, vector<128x128xf32>
    tpu.vector_store %arg7[%c0_11, %c0_12], %16 {strides = array<i32>} : memref<128x128xf32, #tpu.memory_space<vmem>>, vector<128x128xf32>,
    return
  }
  func.func @transform_0(%arg0: i32) -> (i32, i32) {
    %c0_i32 = arith.constant 0 : i32
    %c0_i32_0 = arith.constant 0 : i32
    return %arg0, %c0_i32 : i32, i32
  }
  func.func @transform_1(%arg0: i32) -> (i32, i32) {
    %c0_i32 = arith.constant 0 : i32
    %c0_i32_0 = arith.constant 0 : i32
    %c0_i32_1 = arith.constant 0 : i32
    return %c0_i32, %c0_i32_0 : i32, i32
  }
  func.func @transform_2(%arg0: i32) -> (i32, i32) {
    %c0_i32 = arith.constant 0 : i32
    %c0_i32_0 = arith.constant 0 : i32
    %c0_i32_1 = arith.constant 0 : i32
    return %c0_i32, %c0_i32_0 : i32, i32
  }
  func.func @transform_3(%arg0: i32) -> (i32, i32) {
    %c0_i32 = arith.constant 0 : i32
    %c0_i32_0 = arith.constant 0 : i32
    %c0_i32_1 = arith.constant 0 : i32
    return %c0_i32, %c0_i32_0 : i32, i32
  }
  func.func @transform_4(%arg0: i32) -> (i32, i32) {
    %c0_i32 = arith.constant 0 : i32
    %c0_i32_0 = arith.constant 0 : i32
    %c0_i32_1 = arith.constant 0 : i32
    return %c0_i32, %c0_i32_0 : i32, i32
  }
  func.func @transform_5(%arg0: i32) -> (i32, i32) {
    %c0_i32 = arith.constant 0 : i32
    %c0_i32_0 = arith.constant 0 : i32
    %c0_i32_1 = arith.constant 0 : i32
    return %c0_i32, %c0_i32_0 : i32, i32
  }
  func.func @transform_6(%arg0: i32) -> (i32, i32) {
    %c0_i32 = arith.constant 0 : i32
    %c0_i32_0 = arith.constant 0 : i32
    return %arg0, %c0_i32 : i32, i32
  }
}

</mosaic_0001>

<llo_original>
// kernel: tpu_custom_call.1
$region0: #{tpu_custom_call.1}
  #allocation0 [shape = 'u32[]', space=smem, size = 0x4, offset = 0x4, fixed_abs, tag = 'smem constant byte address 0x4 - core index']
  #allocation1 [shape = 'u32[144,128]{1,0:T(1,128)}', space=vmem, size = 0x12000, scoped, tag = 'internal scratch']
  %s0 = inlined_call_operand.hbm [shape: bf16[128,128], index: 0, kind: input, shape index: {}]
  %s1 = inlined_call_operand.hbm [shape: bf16[128,512], index: 1, kind: input, shape index: {}]
  %s2 = inlined_call_operand.hbm [shape: bf16[128,128], index: 2, kind: input, shape index: {}]
  %s3 = inlined_call_operand.hbm [shape: bf16[512,128], index: 3, kind: input, shape index: {}]
  %s4 = inlined_call_operand.vmem [shape: f32[1,512], index: 4, kind: input, shape index: {}]
  %s5 = inlined_call_operand.vmem [shape: f32[1,512], index: 5, kind: input, shape index: {}]
  %s6 = inlined_call_operand.hbm [shape: f32[128,128], index: 6, kind: output, shape index: {}]
  %s7 = sld [smem:[#allocation0]]
  $region50: #{tpu_custom_call.1} parent=0
    _
  %s9 = ssub.s32 1, %s7
  %s10 = scalar_select 0, %s9, %s7
  $region1: #{tpu_custom_call.1} parent=0
    #allocation2 [shape = 'u8[32768]{0}', space=vmem, size = 0x8000, scoped, tag = 'input window, operand 0, single buffered']
    #allocation3 [shape = 's32[1]{0}', space=sflag, size = 0x4, scoped, tag = 'scoped memory for tpu_custom_call.1']
    #allocation4 [shape = 's32[1]{0}', space=sflag, size = 0x4, scoped, tag = 'scoped memory for tpu_custom_call.1']
    #allocation5 [shape = 'u8[131072]{0}', space=vmem, size = 0x20000, scoped, tag = 'input window, operand 1, single buffered']
    #allocation6 [shape = 's32[1]{0}', space=sflag, size = 0x4, scoped, tag = 'scoped memory for tpu_custom_call.1']
    #allocation7 [shape = 'u8[32768]{0}', space=vmem, size = 0x8000, scoped, tag = 'input window, operand 2, single buffered']
    #allocation8 [shape = 'u8[131072]{0}', space=vmem, size = 0x20000, scoped, tag = 'input window, operand 3, single buffered']
    #allocation9 [shape = 's32[1]{0}', space=sflag, size = 0x4, scoped, tag = 'scoped memory for tpu_custom_call.1']
    #allocation10 [shape = 'u8[65536]{0}', space=vmem, size = 0x10000, scoped, tag = 'output window, operand 0, single buffered']
    %11 = vsyncpa [#allocation3], 0
    %12 = vsyncpa [#allocation6], 0
    %13 = vsyncpa [#allocation9], 0
    %14 = vsyncpa [#allocation4], 0
    // Predicated region
    $region2: #{tpu_custom_call.1} parent=1 // pred_check
      _
    $region3: #{tpu_custom_call.1} parent=1 // pred_check_branch
      %16 = sbr.rel (0) target = $region5
    $region4: #{tpu_custom_call.1} parent=1 // pred_region
      %s18 = ssub.s32 1024, 1024
      %19 = vsyncadd [#allocation3], %s18
      %s20 = sshll.u32 [#allocation2], 4
      %s21 = int_to_ptr.vmem [resolvable:$true] %s20
      %26 = dma.hbm_to_vmem [thread:$0]  %s0, 1024, %s21, [#allocation3], 64, 64, 4
    $region5: #{tpu_custom_call.1} parent=1 // pred_fallthru
      _
    // Predicated region
    $region6: #{tpu_custom_call.1} parent=1 // pred_check
      _
    $region7: #{tpu_custom_call.1} parent=1 // pred_check_branch
      %28 = sbr.rel (0) target = $region9
    $region8: #{tpu_custom_call.1} parent=1 // pred_region
      %s30 = ssub.s32 4096, 4096
      %31 = vsyncadd [#allocation6], %s30
      %s32 = sshll.u32 [#allocation5], 4
      %s33 = int_to_ptr.vmem [resolvable:$true] %s32
      %38 = dma.hbm_to_vmem [thread:$0]  %s1, 4096, %s33, [#allocation6], 256, 256, 16
    $region9: #{tpu_custom_call.1} parent=1 // pred_fallthru
      _
    // Predicated region
    $region10: #{tpu_custom_call.1} parent=1 // pred_check
      _
    $region11: #{tpu_custom_call.1} parent=1 // pred_check_branch
      %40 = sbr.rel (0) target = $region13
    $region12: #{tpu_custom_call.1} parent=1 // pred_region
      %s42 = ssub.s32 1024, 1024
      %43 = vsyncadd [#allocation6], %s42
      %s44 = sshll.u32 [#allocation7], 4
      %s45 = int_to_ptr.vmem [resolvable:$true] %s44
      %50 = dma.hbm_to_vmem [thread:$0]  %s2, 1024, %s45, [#allocation6], 64, 64, 4
    $region13: #{tpu_custom_call.1} parent=1 // pred_fallthru
      _
    // Predicated region
    $region14: #{tpu_custom_call.1} parent=1 // pred_check
      _
    $region15: #{tpu_custom_call.1} parent=1 // pred_check_branch
      %52 = sbr.rel (0) target = $region17
    $region16: #{tpu_custom_call.1} parent=1 // pred_region
      %s54 = ssub.s32 4096, 4096
      %55 = vsyncadd [#allocation9], %s54
      %s56 = sshll.u32 [#allocation8], 4
      %s57 = int_to_ptr.vmem [resolvable:$true] %s56
      %62 = dma.hbm_to_vmem [thread:$0]  %s3, 4096, %s57, [#allocation9], 64, 64, 4
    $region17: #{tpu_custom_call.1} parent=1 // pred_fallthru
      _
    // Predicated region
    $region18: #{tpu_custom_call.1} parent=1 // pred_check
      _
    $region19: #{tpu_custom_call.1} parent=1 // pred_check_branch
      %64 = sbr.rel (0) target = $region21
    $region20: #{tpu_custom_call.1} parent=1 // pred_region
      _
    $region21: #{tpu_custom_call.1} parent=1 // pred_fallthru
      _
    // Predicated region
    $region22: #{tpu_custom_call.1} parent=1 // pred_check
      _
    $region23: #{tpu_custom_call.1} parent=1 // pred_check_branch
      %66 = sbr.rel (0) target = $region25
    $region24: #{tpu_custom_call.1} parent=1 // pred_region
      _
    $region25: #{tpu_custom_call.1} parent=1 // pred_fallthru
      _
    // Predicated region
    $region26: #{tpu_custom_call.1} parent=1 // pred_check
      _
    $region27: #{tpu_custom_call.1} parent=1 // pred_check_branch
      %68 = sbr.rel (0) target = $region29
    $region28: #{tpu_custom_call.1} parent=1 // pred_region
      %69 = dma.done [#allocation3], 1024
    $region29: #{tpu_custom_call.1} parent=1 // pred_fallthru
      _
    // Predicated region
    $region30: #{tpu_custom_call.1} parent=1 // pred_check
      _
    $region31: #{tpu_custom_call.1} parent=1 // pred_check_branch
      %71 = sbr.rel (0) target = $region33
    $region32: #{tpu_custom_call.1} parent=1 // pred_region
      %72 = dma.done [#allocation6], 4096
    $region33: #{tpu_custom_call.1} parent=1 // pred_fallthru
      _
    // Predicated region
    $region34: #{tpu_custom_call.1} parent=1 // pred_check
      _
    $region35: #{tpu_custom_call.1} parent=1 // pred_check_branch
      %74 = sbr.rel (0) target = $region37
    $region36: #{tpu_custom_call.1} parent=1 // pred_region
      %75 = dma.done [#allocation6], 1024
    $region37: #{tpu_custom_call.1} parent=1 // pred_fallthru
      _
    // Predicated region
    $region38: #{tpu_custom_call.1} parent=1 // pred_check
      _
    $region39: #{tpu_custom_call.1} parent=1 // pred_check_branch
      %77 = sbr.rel (0) target = $region41
    $region40: #{tpu_custom_call.1} parent=1 // pred_region
      %78 = dma.done [#allocation9], 4096
    $region41: #{tpu_custom_call.1} parent=1 // pred_fallthru
      _
    %v80 = vld [vmem:[#allocation2] sm:$0xf]
    %v81 = vld [vmem:[#allocation2 + $0x4] sm:$0xf]
    %v82 = vld [vmem:[#allocation2 + $0x8] sm:$0xf]
    %v83 = vld [vmem:[#allocation2 + $0xc] sm:$0xf]
    %v84 = vld [vmem:[#allocation2 + $0x10] sm:$0xf]
    %v85 = vld [vmem:[#allocation2 + $0x14] sm:$0xf]
    %v86 = vld [vmem:[#allocation2 + $0x18] sm:$0xf]
    %v87 = vld [vmem:[#allocation2 + $0x1c] sm:$0xf]
    %v88 = vld [vmem:[#allocation2 + $0x20] sm:$0xf]
    %v89 = vld [vmem:[#allocation2 + $0x24] sm:$0xf]
    %v90 = vld [vmem:[#allocation2 + $0x28] sm:$0xf]
    %v91 = vld [vmem:[#allocation2 + $0x2c] sm:$0xf]
    %v92 = vld [vmem:[#allocation2 + $0x30] sm:$0xf]
    %v93 = vld [vmem:[#allocation2 + $0x34] sm:$0xf]
    %v94 = vld [vmem:[#allocation2 + $0x38] sm:$0xf]
    %v95 = vld [vmem:[#allocation2 + $0x3c] sm:$0xf]
    %v96 = vld [vmem:[#allocation5] sm:$0xff]
    %v97 = vld [vmem:[#allocation5 + $0x8] sm:$0xff]
    %v98 = vld [vmem:[#allocation5 + $0x10] sm:$0xff]
    %v99 = vld [vmem:[#allocation5 + $0x18] sm:$0xff]
    %v100 = vld [vmem:[#allocation5 + $0x20] sm:$0xff]
    %v101 = vld [vmem:[#allocation5 + $0x28] sm:$0xff]
    %v102 = vld [vmem:[#allocation5 + $0x30] sm:$0xff]
    %v103 = vld [vmem:[#allocation5 + $0x38] sm:$0xff]
    %v104 = vld [vmem:[#allocation5 + $0x40] sm:$0xff]
    %v105 = vld [vmem:[#allocation5 + $0x48] sm:$0xff]
    %v106 = vld [vmem:[#allocation5 + $0x50] sm:$0xff]
    %v107 = vld [vmem:[#allocation5 + $0x58] sm:$0xff]
    %v108 = vld [vmem:[#allocation5 + $0x60] sm:$0xff]
    %v109 = vld [vmem:[#allocation5 + $0x68] sm:$0xff]
    %v110 = vld [vmem:[#allocation5 + $0x70] sm:$0xff]
    %v111 = vld [vmem:[#allocation5 + $0x78] sm:$0xff]
    %v112 = vld [vmem:[#allocation5 + $0x80] sm:$0xff]
    %v113 = vld [vmem:[#allocation5 + $0x88] sm:$0xff]
    %v114 = vld [vmem:[#allocation5 + $0x90] sm:$0xff]
    %v115 = vld [vmem:[#allocation5 + $0x98] sm:$0xff]
    %v116 = vld [vmem:[#allocation5 + $0xa0] sm:$0xff]
    %v117 = vld [vmem:[#allocation5 + $0xa8] sm:$0xff]
    %v118 = vld [vmem:[#allocation5 + $0xb0] sm:$0xff]
    %v119 = vld [vmem:[#allocation5 + $0xb8] sm:$0xff]
    %v120 = vld [vmem:[#allocation5 + $0xc0] sm:$0xff]
    %v121 = vld [vmem:[#allocation5 + $0xc8] sm:$0xff]
    %v122 = vld [vmem:[#allocation5 + $0xd0] sm:$0xff]
    %v123 = vld [vmem:[#allocation5 + $0xd8] sm:$0xff]
    %v124 = vld [vmem:[#allocation5 + $0xe0] sm:$0xff]
    %v125 = vld [vmem:[#allocation5 + $0xe8] sm:$0xff]
    %v126 = vld [vmem:[#allocation5 + $0xf0] sm:$0xff]
    %v127 = vld [vmem:[#allocation5 + $0xf8] sm:$0xff]
    %v144 = vunpack.c.l.b16 %v80
    %v145 = vunpack.c.l.b16 %v81
    %v146 = vunpack.c.l.b16 %v82
    %v147 = vunpack.c.l.b16 %v83
    %v148 = vunpack.c.l.b16 %v84
    %v149 = vunpack.c.l.b16 %v85
    %v150 = vunpack.c.l.b16 %v86
    %v151 = vunpack.c.l.b16 %v87
    %v152 = vunpack.c.l.b16 %v88
    %v153 = vunpack.c.l.b16 %v89
    %v154 = vunpack.c.l.b16 %v90
    %v155 = vunpack.c.l.b16 %v91
    %v156 = vunpack.c.l.b16 %v92
    %v157 = vunpack.c.l.b16 %v93
    %v158 = vunpack.c.l.b16 %v94
    %v159 = vunpack.c.l.b16 %v95
    %v160 = vpack.c.b16 %v145, %v144
    %v161 = vpack.c.b16 %v147, %v146
    %v162 = vpack.c.b16 %v149, %v148
    %v163 = vpack.c.b16 %v151, %v150
    %v164 = vpack.c.b16 %v153, %v152
    %v165 = vpack.c.b16 %v155, %v154
    %v166 = vpack.c.b16 %v157, %v156
    %v167 = vpack.c.b16 %v159, %v158
    %v208 = vunpack.c.l.b16 %v96
    %v209 = vunpack.c.h.b16 %v96
    %v210 = vunpack.c.l.b16 %v97
    %v211 = vunpack.c.h.b16 %v97
    %v212 = vunpack.c.l.b16 %v98
    %v213 = vunpack.c.h.b16 %v98
    %v214 = vunpack.c.l.b16 %v99
    %v215 = vunpack.c.h.b16 %v99
    %v216 = vunpack.c.l.b16 %v100
    %v217 = vunpack.c.h.b16 %v100
    %v218 = vunpack.c.l.b16 %v101
    %v219 = vunpack.c.h.b16 %v101
    %v220 = vunpack.c.l.b16 %v102
    %v221 = vunpack.c.h.b16 %v102
    %v222 = vunpack.c.l.b16 %v103
    %v223 = vunpack.c.h.b16 %v103
    %v224 = vunpack.c.l.b16 %v104
    %v225 = vunpack.c.h.b16 %v104
    %v226 = vunpack.c.l.b16 %v105
    %v227 = vunpack.c.h.b16 %v105
    %v228 = vunpack.c.l.b16 %v106
    %v229 = vunpack.c.h.b16 %v106
    %v230 = vunpack.c.l.b16 %v107
    %v231 = vunpack.c.h.b16 %v107
    %v232 = vunpack.c.l.b16 %v108
    %v233 = vunpack.c.h.b16 %v108
    %v234 = vunpack.c.l.b16 %v109
    %v235 = vunpack.c.h.b16 %v109
    %v236 = vunpack.c.l.b16 %v110
    %v237 = vunpack.c.h.b16 %v110
    %v238 = vunpack.c.l.b16 %v111
    %v239 = vunpack.c.h.b16 %v111
    %v240 = vunpack.c.l.b16 %v112
    %v241 = vunpack.c.h.b16 %v112
    %v242 = vunpack.c.l.b16 %v113
    %v243 = vunpack.c.h.b16 %v113
    %v244 = vunpack.c.l.b16 %v114
    %v245 = vunpack.c.h.b16 %v114
    %v246 = vunpack.c.l.b16 %v115
    %v247 = vunpack.c.h.b16 %v115
    %v248 = vunpack.c.l.b16 %v116
    %v249 = vunpack.c.h.b16 %v116
    %v250 = vunpack.c.l.b16 %v117
    %v251 = vunpack.c.h.b16 %v117
    %v252 = vunpack.c.l.b16 %v118
    %v253 = vunpack.c.h.b16 %v118
    %v254 = vunpack.c.l.b16 %v119
    %v255 = vunpack.c.h.b16 %v119
    %v256 = vunpack.c.l.b16 %v120
    %v257 = vunpack.c.h.b16 %v120
    %v258 = vunpack.c.l.b16 %v121
    %v259 = vunpack.c.h.b16 %v121
    %v260 = vunpack.c.l.b16 %v122
    %v261 = vunpack.c.h.b16 %v122
    %v262 = vunpack.c.l.b16 %v123
    %v263 = vunpack.c.h.b16 %v123
    %v264 = vunpack.c.l.b16 %v124
    %v265 = vunpack.c.h.b16 %v124
    %v266 = vunpack.c.l.b16 %v125
    %v267 = vunpack.c.h.b16 %v125
    %v268 = vunpack.c.l.b16 %v126
    %v269 = vunpack.c.h.b16 %v126
    %v270 = vunpack.c.l.b16 %v127
    %v271 = vunpack.c.h.b16 %v127
    %v272 = vpack.c.b16 %v212, %v208
    %v273 = vpack.c.b16 %v213, %v209
    %v274 = vpack.c.b16 %v214, %v210
    %v275 = vpack.c.b16 %v215, %v211
    %v276 = vpack.c.b16 %v220, %v216
    %v277 = vpack.c.b16 %v221, %v217
    %v278 = vpack.c.b16 %v222, %v218
    %v279 = vpack.c.b16 %v223, %v219
    %v280 = vpack.c.b16 %v228, %v224
    %v281 = vpack.c.b16 %v229, %v225
    %v282 = vpack.c.b16 %v230, %v226
    %v283 = vpack.c.b16 %v231, %v227
    %v284 = vpack.c.b16 %v236, %v232
    %v285 = vpack.c.b16 %v237, %v233
    %v286 = vpack.c.b16 %v238, %v234
    %v287 = vpack.c.b16 %v239, %v235
    %v288 = vpack.c.b16 %v244, %v240
    %v289 = vpack.c.b16 %v245, %v241
    %v290 = vpack.c.b16 %v246, %v242
    %v291 = vpack.c.b16 %v247, %v243
    %v292 = vpack.c.b16 %v252, %v248
    %v293 = vpack.c.b16 %v253, %v249
    %v294 = vpack.c.b16 %v254, %v250
    %v295 = vpack.c.b16 %v255, %v251
    %v296 = vpack.c.b16 %v260, %v256
    %v297 = vpack.c.b16 %v261, %v257
    %v298 = vpack.c.b16 %v262, %v258
    %v299 = vpack.c.b16 %v263, %v259
    %v300 = vpack.c.b16 %v268, %v264
    %v301 = vpack.c.b16 %v269, %v265
    %v302 = vpack.c.b16 %v270, %v266
    %v303 = vpack.c.b16 %v271, %v267
    %336 = vmatprep.subr.bf16.mxu0 %v273
    %337 = vmatpush1.bf16.msra.mxu0 %v272
    %338 = vmatprep.subr.bf16.mxu0 %v277
    %339 = vmatpush1.bf16.msra.mxu0 %v276
    %340 = vmatprep.subr.bf16.mxu0 %v281
    %341 = vmatpush1.bf16.msra.mxu0 %v280
    %342 = vmatprep.subr.bf16.mxu0 %v285
    %343 = vmatpush1.bf16.msra.mxu0 %v284
    %344 = vmatprep.subr.bf16.mxu0 %v289
    %345 = vmatpush1.bf16.msra.mxu0 %v288
    %346 = vmatprep.subr.bf16.mxu0 %v293
    %347 = vmatpush1.bf16.msra.mxu0 %v292
    %348 = vmatprep.subr.bf16.mxu0 %v297
    %349 = vmatpush1.bf16.msra.mxu0 %v296
    %350 = vmatprep.subr.bf16.mxu0 %v301
    %351 = vmatpush1.bf16.msra.mxu0 %v300
    %352 = vmatprep.subr.bf16.mxu0 0
    %353 = vmatpush1.bf16.msra.mxu0 0
    %354 = vmatprep.subr.bf16.mxu0 0
    %355 = vmatpush1.bf16.msra.mxu0 0
    %356 = vmatprep.subr.bf16.mxu0 0
    %357 = vmatpush1.bf16.msra.mxu0 0
    %358 = vmatprep.subr.bf16.mxu0 0
    %359 = vmatpush1.bf16.msra.mxu0 0
    %360 = vmatprep.subr.bf16.mxu0 0
    %361 = vmatpush1.bf16.msra.mxu0 0
    %362 = vmatprep.subr.bf16.mxu0 0
    %363 = vmatpush1.bf16.msra.mxu0 0
    %364 = vmatprep.subr.bf16.mxu0 0
    %365 = vmatpush1.bf16.msra.mxu0 0
    %366 = vmatprep.subr.bf16.mxu0 0
    %367 = vmatpush1.bf16.msra.mxu0 0
    %368 = vmatprep.mubr.bf16.mxu0 0
    %369 = vmatmul.mubr.bf16.gmra.mrb[0].mxu0 %v160
    %v370 = vpop.f32.mrb[0].mxu0
    %v371 = vadd.f32 0.0, %v370
    %v372 = vpop.f32.mrb[0].mxu0
    %v373 = vadd.f32 0.0, %v372
    %v374 = vpop.f32.mrb[0].mxu0
    %v375 = vadd.f32 0.0, %v374
    %v376 = vpop.f32.mrb[0].mxu0
    %v377 = vadd.f32 0.0, %v376
    %378 = vmatprep.mubr.bf16.mxu0 0
    %379 = vmatmul.mubr.bf16.gmra.mrb[0].mxu0 %v161
    %v380 = vpop.f32.mrb[0].mxu0
    %v381 = vadd.f32 0.0, %v380
    %v382 = vpop.f32.mrb[0].mxu0
    %v383 = vadd.f32 0.0, %v382
    %v384 = vpop.f32.mrb[0].mxu0
    %v385 = vadd.f32 0.0, %v384
    %v386 = vpop.f32.mrb[0].mxu0
    %v387 = vadd.f32 0.0, %v386
    %388 = vmatprep.mubr.bf16.mxu0 0
    %389 = vmatmul.mubr.bf16.gmra.mrb[0].mxu0 %v162
    %v390 = vpop.f32.mrb[0].mxu0
    %v391 = vadd.f32 0.0, %v390
    %v392 = vpop.f32.mrb[0].mxu0
    %v393 = vadd.f32 0.0, %v392
    %v394 = vpop.f32.mrb[0].mxu0
    %v395 = vadd.f32 0.0, %v394
    %v396 = vpop.f32.mrb[0].mxu0
    %v397 = vadd.f32 0.0, %v396
    %398 = vmatprep.mubr.bf16.mxu0 0
    %399 = vmatmul.mubr.bf16.gmra.mrb[0].mxu0 %v163
    %v400 = vpop.f32.mrb[0].mxu0
    %v401 = vadd.f32 0.0, %v400
    %v402 = vpop.f32.mrb[0].mxu0
    %v403 = vadd.f32 0.0, %v402
    %v404 = vpop.f32.mrb[0].mxu0
    %v405 = vadd.f32 0.0, %v404
    %v406 = vpop.f32.mrb[0].mxu0
    %v407 = vadd.f32 0.0, %v406
    %408 = vmatprep.mubr.bf16.mxu0 0
    %409 = vmatmul.mubr.bf16.gmra.mrb[0].mxu0 %v164
    %v410 = vpop.f32.mrb[0].mxu0
    %v411 = vadd.f32 0.0, %v410
    %v412 = vpop.f32.mrb[0].mxu0
    %v413 = vadd.f32 0.0, %v412
    %v414 = vpop.f32.mrb[0].mxu0
    %v415 = vadd.f32 0.0, %v414
    %v416 = vpop.f32.mrb[0].mxu0
    %v417 = vadd.f32 0.0, %v416
    %418 = vmatprep.mubr.bf16.mxu0 0
    %419 = vmatmul.mubr.bf16.gmra.mrb[0].mxu0 %v165
    %v420 = vpop.f32.mrb[0].mxu0
    %v421 = vadd.f32 0.0, %v420
    %v422 = vpop.f32.mrb[0].mxu0
    %v423 = vadd.f32 0.0, %v422
    %v424 = vpop.f32.mrb[0].mxu0
    %v425 = vadd.f32 0.0, %v424
    %v426 = vpop.f32.mrb[0].mxu0
    %v427 = vadd.f32 0.0, %v426
    %428 = vmatprep.mubr.bf16.mxu0 0
    %429 = vmatmul.mubr.bf16.gmra.mrb[0].mxu0 %v166
    %v430 = vpop.f32.mrb[0].mxu0
    %v431 = vadd.f32 0.0, %v430
    %v432 = vpop.f32.mrb[0].mxu0
    %v433 = vadd.f32 0.0, %v432
    %v434 = vpop.f32.mrb[0].mxu0
    %v435 = vadd.f32 0.0, %v434
    %v436 = vpop.f32.mrb[0].mxu0
    %v437 = vadd.f32 0.0, %v436
    %438 = vmatprep.mubr.bf16.mxu0 0
    %439 = vmatmul.mubr.bf16.gmra.mrb[0].mxu0 %v167
    %v440 = vpop.f32.mrb[0].mxu0
    %v441 = vadd.f32 0.0, %v440
    %v442 = vpop.f32.mrb[0].mxu0
    %v443 = vadd.f32 0.0, %v442
    %v444 = vpop.f32.mrb[0].mxu0
    %v445 = vadd.f32 0.0, %v444
    %v446 = vpop.f32.mrb[0].mxu0
    %v447 = vadd.f32 0.0, %v446
    %448 = vdwg.mxu0
    %449 = vmatprep.subr.bf16.mxu0 %v275
    %450 = vmatpush1.bf16.msra.mxu0 %v274
    %451 = vmatprep.subr.bf16.mxu0 %v279
    %452 = vmatpush1.bf16.msra.mxu0 %v278
    %453 = vmatprep.subr.bf16.mxu0 %v283
    %454 = vmatpush1.bf16.msra.mxu0 %v282
    %455 = vmatprep.subr.bf16.mxu0 %v287
    %456 = vmatpush1.bf16.msra.mxu0 %v286
    %457 = vmatprep.subr.bf16.mxu0 %v291
    %458 = vmatpush1.bf16.msra.mxu0 %v290
    %459 = vmatprep.subr.bf16.mxu0 %v295
    %460 = vmatpush1.bf16.msra.mxu0 %v294
    %461 = vmatprep.subr.bf16.mxu0 %v299
    %462 = vmatpush1.bf16.msra.mxu0 %v298
    %463 = vmatprep.subr.bf16.mxu0 %v303
    %464 = vmatpush1.bf16.msra.mxu0 %v302
    %465 = vmatprep.subr.bf16.mxu0 0
    %466 = vmatpush1.bf16.msra.mxu0 0
    %467 = vmatprep.subr.bf16.mxu0 0
    %468 = vmatpush1.bf16.msra.mxu0 0
    %469 = vmatprep.subr.bf16.mxu0 0
    %470 = vmatpush1.bf16.msra.mxu0 0
    %471 = vmatprep.subr.bf16.mxu0 0
    %472 = vmatpush1.bf16.msra.mxu0 0
    %473 = vmatprep.subr.bf16.mxu0 0
    %474 = vmatpush1.bf16.msra.mxu0 0
    %475 = vmatprep.subr.bf16.mxu0 0
    %476 = vmatpush1.bf16.msra.mxu0 0
    %477 = vmatprep.subr.bf16.mxu0 0
    %478 = vmatpush1.bf16.msra.mxu0 0
    %479 = vmatprep.subr.bf16.mxu0 0
    %480 = vmatpush1.bf16.msra.mxu0 0
    %481 = vmatprep.mubr.bf16.mxu0 0
    %482 = vmatmul.mubr.bf16.gmra.mrb[0].mxu0 %v160
    %v483 = vpop.f32.mrb[0].mxu0
    %v484 = vadd.f32 0.0, %v483
    %v485 = vpop.f32.mrb[0].mxu0
    %v486 = vadd.f32 0.0, %v485
    %v487 = vpop.f32.mrb[0].mxu0
    %v488 = vadd.f32 0.0, %v487
    %v489 = vpop.f32.mrb[0].mxu0
    %v490 = vadd.f32 0.0, %v489
    %491 = vmatprep.mubr.bf16.mxu0 0
    %492 = vmatmul.mubr.bf16.gmra.mrb[0].mxu0 %v161
    %v493 = vpop.f32.mrb[0].mxu0
    %v494 = vadd.f32 0.0, %v493
    %v495 = vpop.f32.mrb[0].mxu0
    %v496 = vadd.f32 0.0, %v495
    %v497 = vpop.f32.mrb[0].mxu0
    %v498 = vadd.f32 0.0, %v497
    %v499 = vpop.f32.mrb[0].mxu0
    %v500 = vadd.f32 0.0, %v499
    %501 = vmatprep.mubr.bf16.mxu0 0
    %502 = vmatmul.mubr.bf16.gmra.mrb[0].mxu0 %v162
    %v503 = vpop.f32.mrb[0].mxu0
    %v504 = vadd.f32 0.0, %v503
    %v505 = vpop.f32.mrb[0].mxu0
    %v506 = vadd.f32 0.0, %v505
    %v507 = vpop.f32.mrb[0].mxu0
    %v508 = vadd.f32 0.0, %v507
    %v509 = vpop.f32.mrb[0].mxu0
    %v510 = vadd.f32 0.0, %v509
    %511 = vmatprep.mubr.bf16.mxu0 0
    %512 = vmatmul.mubr.bf16.gmra.mrb[0].mxu0 %v163
    %v513 = vpop.f32.mrb[0].mxu0
    %v514 = vadd.f32 0.0, %v513
    %v515 = vpop.f32.mrb[0].mxu0
    %v516 = vadd.f32 0.0, %v515
    %v517 = vpop.f32.mrb[0].mxu0
    %v518 = vadd.f32 0.0, %v517
    %v519 = vpop.f32.mrb[0].mxu0
    %v520 = vadd.f32 0.0, %v519
    %521 = vmatprep.mubr.bf16.mxu0 0
    %522 = vmatmul.mubr.bf16.gmra.mrb[0].mxu0 %v164
    %v523 = vpop.f32.mrb[0].mxu0
    %v524 = vadd.f32 0.0, %v523
    %v525 = vpop.f32.mrb[0].mxu0
    %v526 = vadd.f32 0.0, %v525
    %v527 = vpop.f32.mrb[0].mxu0
    %v528 = vadd.f32 0.0, %v527
    %v529 = vpop.f32.mrb[0].mxu0
    %v530 = vadd.f32 0.0, %v529
    %531 = vmatprep.mubr.bf16.mxu0 0
    %532 = vmatmul.mubr.bf16.gmra.mrb[0].mxu0 %v165
    %v533 = vpop.f32.mrb[0].mxu0
    %v534 = vadd.f32 0.0, %v533
    %v535 = vpop.f32.mrb[0].mxu0
    %v536 = vadd.f32 0.0, %v535
    %v537 = vpop.f32.mrb[0].mxu0
    %v538 = vadd.f32 0.0, %v537
    %v539 = vpop.f32.mrb[0].mxu0
    %v540 = vadd.f32 0.0, %v539
    %541 = vmatprep.mubr.bf16.mxu0 0
    %542 = vmatmul.mubr.bf16.gmra.mrb[0].mxu0 %v166
    %v543 = vpop.f32.mrb[0].mxu0
    %v544 = vadd.f32 0.0, %v543
    %v545 = vpop.f32.mrb[0].mxu0
    %v546 = vadd.f32 0.0, %v545
    %v547 = vpop.f32.mrb[0].mxu0
    %v548 = vadd.f32 0.0, %v547
    %v549 = vpop.f32.mrb[0].mxu0
    %v550 = vadd.f32 0.0, %v549
    %551 = vmatprep.mubr.bf16.mxu0 0
    %552 = vmatmul.mubr.bf16.gmra.mrb[0].mxu0 %v167
    %v553 = vpop.f32.mrb[0].mxu0
    %v554 = vadd.f32 0.0, %v553
    %v555 = vpop.f32.mrb[0].mxu0
    %v556 = vadd.f32 0.0, %v555
    %v557 = vpop.f32.mrb[0].mxu0
    %v558 = vadd.f32 0.0, %v557
    %v559 = vpop.f32.mrb[0].mxu0
    %v560 = vadd.f32 0.0, %v559
    %561 = vdwg.mxu0
    %v562 = vmax.f32 %v371, 0.0
    %v563 = vmax.f32 %v373, 0.0
    %v564 = vmax.f32 %v484, 0.0
    %v565 = vmax.f32 %v486, 0.0
    %v566 = vmax.f32 %v375, 0.0
    %v567 = vmax.f32 %v377, 0.0
    %v568 = vmax.f32 %v488, 0.0
    %v569 = vmax.f32 %v490, 0.0
    %v570 = vmax.f32 %v381, 0.0
    %v571 = vmax.f32 %v383, 0.0
    %v572 = vmax.f32 %v494, 0.0
    %v573 = vmax.f32 %v496, 0.0
    %v574 = vmax.f32 %v385, 0.0
    %v575 = vmax.f32 %v387, 0.0
    %v576 = vmax.f32 %v498, 0.0
    %v577 = vmax.f32 %v500, 0.0
    %v578 = vmax.f32 %v391, 0.0
    %v579 = vmax.f32 %v393, 0.0
    %v580 = vmax.f32 %v504, 0.0
    %v581 = vmax.f32 %v506, 0.0
    %v582 = vmax.f32 %v395, 0.0
    %v583 = vmax.f32 %v397, 0.0
    %v584 = vmax.f32 %v508, 0.0
    %v585 = vmax.f32 %v510, 0.0
    %v586 = vmax.f32 %v401, 0.0
    %v587 = vmax.f32 %v403, 0.0
    %v588 = vmax.f32 %v514, 0.0
    %v589 = vmax.f32 %v516, 0.0
    %v590 = vmax.f32 %v405, 0.0
    %v591 = vmax.f32 %v407, 0.0
    %v592 = vmax.f32 %v518, 0.0
    %v593 = vmax.f32 %v520, 0.0
    %v594 = vmax.f32 %v411, 0.0
    %v595 = vmax.f32 %v413, 0.0
    %v596 = vmax.f32 %v524, 0.0
    %v597 = vmax.f32 %v526, 0.0
    %v598 = vmax.f32 %v415, 0.0
    %v599 = vmax.f32 %v417, 0.0
    %v600 = vmax.f32 %v528, 0.0
    %v601 = vmax.f32 %v530, 0.0
    %v602 = vmax.f32 %v421, 0.0
    %v603 = vmax.f32 %v423, 0.0
    %v604 = vmax.f32 %v534, 0.0
    %v605 = vmax.f32 %v536, 0.0
    %v606 = vmax.f32 %v425, 0.0
    %v607 = vmax.f32 %v427, 0.0
    %v608 = vmax.f32 %v538, 0.0
    %v609 = vmax.f32 %v540, 0.0
    %v610 = vmax.f32 %v431, 0.0
    %v611 = vmax.f32 %v433, 0.0
    %v612 = vmax.f32 %v544, 0.0
    %v613 = vmax.f32 %v546, 0.0
    %v614 = vmax.f32 %v435, 0.0
    %v615 = vmax.f32 %v437, 0.0
    %v616 = vmax.f32 %v548, 0.0
    %v617 = vmax.f32 %v550, 0.0
    %v618 = vmax.f32 %v441, 0.0
    %v619 = vmax.f32 %v443, 0.0
    %v620 = vmax.f32 %v554, 0.0
    %v621 = vmax.f32 %v556, 0.0
    %v622 = vmax.f32 %v445, 0.0
    %v623 = vmax.f32 %v447, 0.0
    %v624 = vmax.f32 %v558, 0.0
    %v625 = vmax.f32 %v560, 0.0
    %v626 = vmul.f32 %v562, %v562
    %v627 = vmul.f32 %v563, %v563
    %v628 = vmul.f32 %v564, %v564
    %v629 = vmul.f32 %v565, %v565
    %v630 = vmul.f32 %v566, %v566
    %v631 = vmul.f32 %v567, %v567
    %v632 = vmul.f32 %v568, %v568
    %v633 = vmul.f32 %v569, %v569
    %v634 = vmul.f32 %v570, %v570
    %v635 = vmul.f32 %v571, %v571
    %v636 = vmul.f32 %v572, %v572
    %v637 = vmul.f32 %v573, %v573
    %v638 = vmul.f32 %v574, %v574
    %v639 = vmul.f32 %v575, %v575
    %v640 = vmul.f32 %v576, %v576
    %v641 = vmul.f32 %v577, %v577
    %v642 = vmul.f32 %v578, %v578
    %v643 = vmul.f32 %v579, %v579
    %v644 = vmul.f32 %v580, %v580
    %v645 = vmul.f32 %v581, %v581
    %v646 = vmul.f32 %v582, %v582
    %v647 = vmul.f32 %v583, %v583
    %v648 = vmul.f32 %v584, %v584
    %v649 = vmul.f32 %v585, %v585
    %v650 = vmul.f32 %v586, %v586
    %v651 = vmul.f32 %v587, %v587
    %v652 = vmul.f32 %v588, %v588
    %v653 = vmul.f32 %v589, %v589
    %v654 = vmul.f32 %v590, %v590
    %v655 = vmul.f32 %v591, %v591
    %v656 = vmul.f32 %v592, %v592
    %v657 = vmul.f32 %v593, %v593
    %v658 = vmul.f32 %v594, %v594
    %v659 = vmul.f32 %v595, %v595
    %v660 = vmul.f32 %v596, %v596
    %v661 = vmul.f32 %v597, %v597
    %v662 = vmul.f32 %v598, %v598
    %v663 = vmul.f32 %v599, %v599
    %v664 = vmul.f32 %v600, %v600
    %v665 = vmul.f32 %v601, %v601
    %v666 = vmul.f32 %v602, %v602
    %v667 = vmul.f32 %v603, %v603
    %v668 = vmul.f32 %v604, %v604
    %v669 = vmul.f32 %v605, %v605
    %v670 = vmul.f32 %v606, %v606
    %v671 = vmul.f32 %v607, %v607
    %v672 = vmul.f32 %v608, %v608
    %v673 = vmul.f32 %v609, %v609
    %v674 = vmul.f32 %v610, %v610
    %v675 = vmul.f32 %v611, %v611
    %v676 = vmul.f32 %v612, %v612
    %v677 = vmul.f32 %v613, %v613
    %v678 = vmul.f32 %v614, %v614
    %v679 = vmul.f32 %v615, %v615
    %v680 = vmul.f32 %v616, %v616
    %v681 = vmul.f32 %v617, %v617
    %v682 = vmul.f32 %v618, %v618
    %v683 = vmul.f32 %v619, %v619
    %v684 = vmul.f32 %v620, %v620
    %v685 = vmul.f32 %v621, %v621
    %v686 = vmul.f32 %v622, %v622
    %v687 = vmul.f32 %v623, %v623
    %v688 = vmul.f32 %v624, %v624
    %v689 = vmul.f32 %v625, %v625
    %v690 = vpack.c.bf16 %v630, %v626
    %v691 = vpack.c.bf16 %v631, %v627
    %v692 = vpack.c.bf16 %v632, %v628
    %v693 = vpack.c.bf16 %v633, %v629
    %v694 = vpack.c.bf16 %v638, %v634
    %v695 = vpack.c.bf16 %v639, %v635
    %v696 = vpack.c.bf16 %v640, %v636
    %v697 = vpack.c.bf16 %v641, %v637
    %v698 = vpack.c.bf16 %v646, %v642
    %v699 = vpack.c.bf16 %v647, %v643
    %v700 = vpack.c.bf16 %v648, %v644
    %v701 = vpack.c.bf16 %v649, %v645
    %v702 = vpack.c.bf16 %v654, %v650
    %v703 = vpack.c.bf16 %v655, %v651
    %v704 = vpack.c.bf16 %v656, %v652
    %v705 = vpack.c.bf16 %v657, %v653
    %v706 = vpack.c.bf16 %v662, %v658
    %v707 = vpack.c.bf16 %v663, %v659
    %v708 = vpack.c.bf16 %v664, %v660
    %v709 = vpack.c.bf16 %v665, %v661
    %v710 = vpack.c.bf16 %v670, %v666
    %v711 = vpack.c.bf16 %v671, %v667
    %v712 = vpack.c.bf16 %v672, %v668
    %v713 = vpack.c.bf16 %v673, %v669
    %v714 = vpack.c.bf16 %v678, %v674
    %v715 = vpack.c.bf16 %v679, %v675
    %v716 = vpack.c.bf16 %v680, %v676
    %v717 = vpack.c.bf16 %v681, %v677
    %v718 = vpack.c.bf16 %v686, %v682
    %v719 = vpack.c.bf16 %v687, %v683
    %v720 = vpack.c.bf16 %v688, %v684
    %v721 = vpack.c.bf16 %v689, %v685
    %v722 = vld [vmem:[#allocation8] sm:$0xf]
    %v723 = vld [vmem:[#allocation8 + $0x4] sm:$0xf]
    %v724 = vld [vmem:[#allocation8 + $0x8] sm:$0xf]
    %v725 = vld [vmem:[#allocation8 + $0xc] sm:$0xf]
    %v726 = vld [vmem:[#allocation8 + $0x10] sm:$0xf]
    %v727 = vld [vmem:[#allocation8 + $0x14] sm:$0xf]
    %v728 = vld [vmem:[#allocation8 + $0x18] sm:$0xf]
    %v729 = vld [vmem:[#allocation8 + $0x1c] sm:$0xf]
    %v730 = vld [vmem:[#allocation8 + $0x20] sm:$0xf]
    %v731 = vld [vmem:[#allocation8 + $0x24] sm:$0xf]
    %v732 = vld [vmem:[#allocation8 + $0x28] sm:$0xf]
    %v733 = vld [vmem:[#allocation8 + $0x2c] sm:$0xf]
    %v734 = vld [vmem:[#allocation8 + $0x30] sm:$0xf]
    %v735 = vld [vmem:[#allocation8 + $0x34] sm:$0xf]
    %v736 = vld [vmem:[#allocation8 + $0x38] sm:$0xf]
    %v737 = vld [vmem:[#allocation8 + $0x3c] sm:$0xf]
    %v738 = vld [vmem:[#allocation8 + $0x40] sm:$0xf]
    %v739 = vld [vmem:[#allocation8 + $0x44] sm:$0xf]
    %v740 = vld [vmem:[#allocation8 + $0x48] sm:$0xf]
    %v741 = vld [vmem:[#allocation8 + $0x4c] sm:$0xf]
    %v742 = vld [vmem:[#allocation8 + $0x50] sm:$0xf]
    %v743 = vld [vmem:[#allocation8 + $0x54] sm:$0xf]
    %v744 = vld [vmem:[#allocation8 + $0x58] sm:$0xf]
    %v745 = vld [vmem:[#allocation8 + $0x5c] sm:$0xf]
    %v746 = vld [vmem:[#allocation8 + $0x60] sm:$0xf]
    %v747 = vld [vmem:[#allocation8 + $0x64] sm:$0xf]
    %v748 = vld [vmem:[#allocation8 + $0x68] sm:$0xf]
    %v749 = vld [vmem:[#allocation8 + $0x6c] sm:$0xf]
    %v750 = vld [vmem:[#allocation8 + $0x70] sm:$0xf]
    %v751 = vld [vmem:[#allocation8 + $0x74] sm:$0xf]
    %v752 = vld [vmem:[#allocation8 + $0x78] sm:$0xf]
    %v753 = vld [vmem:[#allocation8 + $0x7c] sm:$0xf]
    %v754 = vld [vmem:[#allocation8 + $0x80] sm:$0xf]
    %v755 = vld [vmem:[#allocation8 + $0x84] sm:$0xf]
    %v756 = vld [vmem:[#allocation8 + $0x88] sm:$0xf]
    %v757 = vld [vmem:[#allocation8 + $0x8c] sm:$0xf]
    %v758 = vld [vmem:[#allocation8 + $0x90] sm:$0xf]
    %v759 = vld [vmem:[#allocation8 + $0x94] sm:$0xf]
    %v760 = vld [vmem:[#allocation8 + $0x98] sm:$0xf]
    %v761 = vld [vmem:[#allocation8 + $0x9c] sm:$0xf]
    %v762 = vld [vmem:[#allocation8 + $0xa0] sm:$0xf]
    %v763 = vld [vmem:[#allocation8 + $0xa4] sm:$0xf]
    %v764 = vld [vmem:[#allocation8 + $0xa8] sm:$0xf]
    %v765 = vld [vmem:[#allocation8 + $0xac] sm:$0xf]
    %v766 = vld [vmem:[#allocation8 + $0xb0] sm:$0xf]
    %v767 = vld [vmem:[#allocation8 + $0xb4] sm:$0xf]
    %v768 = vld [vmem:[#allocation8 + $0xb8] sm:$0xf]
    %v769 = vld [vmem:[#allocation8 + $0xbc] sm:$0xf]
    %v770 = vld [vmem:[#allocation8 + $0xc0] sm:$0xf]
    %v771 = vld [vmem:[#allocation8 + $0xc4] sm:$0xf]
    %v772 = vld [vmem:[#allocation8 + $0xc8] sm:$0xf]
    %v773 = vld [vmem:[#allocation8 + $0xcc] sm:$0xf]
    %v774 = vld [vmem:[#allocation8 + $0xd0] sm:$0xf]
    %v775 = vld [vmem:[#allocation8 + $0xd4] sm:$0xf]
    %v776 = vld [vmem:[#allocation8 + $0xd8] sm:$0xf]
    %v777 = vld [vmem:[#allocation8 + $0xdc] sm:$0xf]
    %v778 = vld [vmem:[#allocation8 + $0xe0] sm:$0xf]
    %v779 = vld [vmem:[#allocation8 + $0xe4] sm:$0xf]
    %v780 = vld [vmem:[#allocation8 + $0xe8] sm:$0xf]
    %v781 = vld [vmem:[#allocation8 + $0xec] sm:$0xf]
    %v782 = vld [vmem:[#allocation8 + $0xf0] sm:$0xf]
    %v783 = vld [vmem:[#allocation8 + $0xf4] sm:$0xf]
    %v784 = vld [vmem:[#allocation8 + $0xf8] sm:$0xf]
    %v785 = vld [vmem:[#allocation8 + $0xfc] sm:$0xf]
    %v850 = vunpack.c.l.b16 %v722
    %v851 = vunpack.c.l.b16 %v723
    %v852 = vunpack.c.l.b16 %v724
    %v853 = vunpack.c.l.b16 %v725
    %v854 = vunpack.c.l.b16 %v726
    %v855 = vunpack.c.l.b16 %v727
    %v856 = vunpack.c.l.b16 %v728
    %v857 = vunpack.c.l.b16 %v729
    %v858 = vunpack.c.l.b16 %v730
    %v859 = vunpack.c.l.b16 %v731
    %v860 = vunpack.c.l.b16 %v732
    %v861 = vunpack.c.l.b16 %v733
    %v862 = vunpack.c.l.b16 %v734
    %v863 = vunpack.c.l.b16 %v735
    %v864 = vunpack.c.l.b16 %v736
    %v865 = vunpack.c.l.b16 %v737
    %v866 = vunpack.c.l.b16 %v738
    %v867 = vunpack.c.l.b16 %v739
    %v868 = vunpack.c.l.b16 %v740
    %v869 = vunpack.c.l.b16 %v741
    %v870 = vunpack.c.l.b16 %v742
    %v871 = vunpack.c.l.b16 %v743
    %v872 = vunpack.c.l.b16 %v744
    %v873 = vunpack.c.l.b16 %v745
    %v874 = vunpack.c.l.b16 %v746
    %v875 = vunpack.c.l.b16 %v747
    %v876 = vunpack.c.l.b16 %v748
    %v877 = vunpack.c.l.b16 %v749
    %v878 = vunpack.c.l.b16 %v750
    %v879 = vunpack.c.l.b16 %v751
    %v880 = vunpack.c.l.b16 %v752
    %v881 = vunpack.c.l.b16 %v753
    %v882 = vunpack.c.l.b16 %v754
    %v883 = vunpack.c.l.b16 %v755
    %v884 = vunpack.c.l.b16 %v756
    %v885 = vunpack.c.l.b16 %v757
    %v886 = vunpack.c.l.b16 %v758
    %v887 = vunpack.c.l.b16 %v759
    %v888 = vunpack.c.l.b16 %v760
    %v889 = vunpack.c.l.b16 %v761
    %v890 = vunpack.c.l.b16 %v762
    %v891 = vunpack.c.l.b16 %v763
    %v892 = vunpack.c.l.b16 %v764
    %v893 = vunpack.c.l.b16 %v765
    %v894 = vunpack.c.l.b16 %v766
    %v895 = vunpack.c.l.b16 %v767
    %v896 = vunpack.c.l.b16 %v768
    %v897 = vunpack.c.l.b16 %v769
    %v898 = vunpack.c.l.b16 %v770
    %v899 = vunpack.c.l.b16 %v771
    %v900 = vunpack.c.l.b16 %v772
    %v901 = vunpack.c.l.b16 %v773
    %v902 = vunpack.c.l.b16 %v774
    %v903 = vunpack.c.l.b16 %v775
    %v904 = vunpack.c.l.b16 %v776
    %v905 = vunpack.c.l.b16 %v777
    %v906 = vunpack.c.l.b16 %v778
    %v907 = vunpack.c.l.b16 %v779
    %v908 = vunpack.c.l.b16 %v780
    %v909 = vunpack.c.l.b16 %v781
    %v910 = vunpack.c.l.b16 %v782
    %v911 = vunpack.c.l.b16 %v783
    %v912 = vunpack.c.l.b16 %v784
    %v913 = vunpack.c.l.b16 %v785
    %v914 = vpack.c.b16 %v851, %v850
    %v915 = vpack.c.b16 %v853, %v852
    %v916 = vpack.c.b16 %v855, %v854
    %v917 = vpack.c.b16 %v857, %v856
    %v918 = vpack.c.b16 %v859, %v858
    %v919 = vpack.c.b16 %v861, %v860
    %v920 = vpack.c.b16 %v863, %v862
    %v921 = vpack.c.b16 %v865, %v864
    %v922 = vpack.c.b16 %v867, %v866
    %v923 = vpack.c.b16 %v869, %v868
    %v924 = vpack.c.b16 %v871, %v870
    %v925 = vpack.c.b16 %v873, %v872
    %v926 = vpack.c.b16 %v875, %v874
    %v927 = vpack.c.b16 %v877, %v876
    %v928 = vpack.c.b16 %v879, %v878
    %v929 = vpack.c.b16 %v881, %v880
    %v930 = vpack.c.b16 %v883, %v882
    %v931 = vpack.c.b16 %v885, %v884
    %v932 = vpack.c.b16 %v887, %v886
    %v933 = vpack.c.b16 %v889, %v888
    %v934 = vpack.c.b16 %v891, %v890
    %v935 = vpack.c.b16 %v893, %v892
    %v936 = vpack.c.b16 %v895, %v894
    %v937 = vpack.c.b16 %v897, %v896
    %v938 = vpack.c.b16 %v899, %v898
    %v939 = vpack.c.b16 %v901, %v900
    %v940 = vpack.c.b16 %v903, %v902
    %v941 = vpack.c.b16 %v905, %v904
    %v942 = vpack.c.b16 %v907, %v906
    %v943 = vpack.c.b16 %v909, %v908
    %v944 = vpack.c.b16 %v911, %v910
    %v945 = vpack.c.b16 %v913, %v912
    %978 = vmatprep.subr.bf16.mxu0 0
    %979 = vmatpush1.bf16.msra.mxu0 %v914
    %980 = vmatprep.subr.bf16.mxu0 0
    %981 = vmatpush1.bf16.msra.mxu0 %v915
    %982 = vmatprep.subr.bf16.mxu0 0
    %983 = vmatpush1.bf16.msra.mxu0 %v916
    %984 = vmatprep.subr.bf16.mxu0 0
    %985 = vmatpush1.bf16.msra.mxu0 %v917
    %986 = vmatprep.subr.bf16.mxu0 0
    %987 = vmatpush1.bf16.msra.mxu0 %v918
    %988 = vmatprep.subr.bf16.mxu0 0
    %989 = vmatpush1.bf16.msra.mxu0 %v919
    %990 = vmatprep.subr.bf16.mxu0 0
    %991 = vmatpush1.bf16.msra.mxu0 %v920
    %992 = vmatprep.subr.bf16.mxu0 0
    %993 = vmatpush1.bf16.msra.mxu0 %v921
    %994 = vmatprep.subr.bf16.mxu0 0
    %995 = vmatpush1.bf16.msra.mxu0 %v922
    %996 = vmatprep.subr.bf16.mxu0 0
    %997 = vmatpush1.bf16.msra.mxu0 %v923
    %998 = vmatprep.subr.bf16.mxu0 0
    %999 = vmatpush1.bf16.msra.mxu0 %v924
    %1000 = vmatprep.subr.bf16.mxu0 0
    %1001 = vmatpush1.bf16.msra.mxu0 %v925
    %1002 = vmatprep.subr.bf16.mxu0 0
    %1003 = vmatpush1.bf16.msra.mxu0 %v926
    %1004 = vmatprep.subr.bf16.mxu0 0
    %1005 = vmatpush1.bf16.msra.mxu0 %v927
    %1006 = vmatprep.subr.bf16.mxu0 0
    %1007 = vmatpush1.bf16.msra.mxu0 %v928
    %1008 = vmatprep.subr.bf16.mxu0 0
    %1009 = vmatpush1.bf16.msra.mxu0 %v929
    %1010 = vmatprep.mubr.bf16.mxu0 %v691
    %1011 = vmatmul.mubr.bf16.gmra.mrb[0].mxu0 %v690
    %v1012 = vpop.f32.mrb[0].mxu0
    %v1013 = vadd.f32 0.0, %v1012
    %v1014 = vpop.f32.mrb[0].mxu0
    %v1015 = vpop.f32.mrb[0].mxu0
    %v1016 = vadd.f32 0.0, %v1015
    %v1017 = vpop.f32.mrb[0].mxu0
    %1018 = vmatprep.mubr.bf16.mxu0 %v695
    %1019 = vmatmul.mubr.bf16.gmra.mrb[0].mxu0 %v694
    %v1020 = vpop.f32.mrb[0].mxu0
    %v1021 = vadd.f32 0.0, %v1020
    %v1022 = vpop.f32.mrb[0].mxu0
    %v1023 = vpop.f32.mrb[0].mxu0
    %v1024 = vadd.f32 0.0, %v1023
    %v1025 = vpop.f32.mrb[0].mxu0
    %1026 = vmatprep.mubr.bf16.mxu0 %v699
    %1027 = vmatmul.mubr.bf16.gmra.mrb[0].mxu0 %v698
    %v1028 = vpop.f32.mrb[0].mxu0
    %v1029 = vadd.f32 0.0, %v1028
    %v1030 = vpop.f32.mrb[0].mxu0
    %v1031 = vpop.f32.mrb[0].mxu0
    %v1032 = vadd.f32 0.0, %v1031
    %v1033 = vpop.f32.mrb[0].mxu0
    %1034 = vmatprep.mubr.bf16.mxu0 %v703
    %1035 = vmatmul.mubr.bf16.gmra.mrb[0].mxu0 %v702
    %v1036 = vpop.f32.mrb[0].mxu0
    %v1037 = vadd.f32 0.0, %v1036
    %v1038 = vpop.f32.mrb[0].mxu0
    %v1039 = vpop.f32.mrb[0].mxu0
    %v1040 = vadd.f32 0.0, %v1039
    %v1041 = vpop.f32.mrb[0].mxu0
    %1042 = vmatprep.mubr.bf16.mxu0 %v707
    %1043 = vmatmul.mubr.bf16.gmra.mrb[0].mxu0 %v706
    %v1044 = vpop.f32.mrb[0].mxu0
    %v1045 = vadd.f32 0.0, %v1044
    %v1046 = vpop.f32.mrb[0].mxu0
    %v1047 = vpop.f32.mrb[0].mxu0
    %v1048 = vadd.f32 0.0, %v1047
    %v1049 = vpop.f32.mrb[0].mxu0
    %1050 = vmatprep.mubr.bf16.mxu0 %v711
    %1051 = vmatmul.mubr.bf16.gmra.mrb[0].mxu0 %v710
    %v1052 = vpop.f32.mrb[0].mxu0
    %v1053 = vadd.f32 0.0, %v1052
    %v1054 = vpop.f32.mrb[0].mxu0
    %v1055 = vpop.f32.mrb[0].mxu0
    %v1056 = vadd.f32 0.0, %v1055
    %v1057 = vpop.f32.mrb[0].mxu0
    %1058 = vmatprep.mubr.bf16.mxu0 %v715
    %1059 = vmatmul.mubr.bf16.gmra.mrb[0].mxu0 %v714
    %v1060 = vpop.f32.mrb[0].mxu0
    %v1061 = vadd.f32 0.0, %v1060
    %v1062 = vpop.f32.mrb[0].mxu0
    %v1063 = vpop.f32.mrb[0].mxu0
    %v1064 = vadd.f32 0.0, %v1063
    %v1065 = vpop.f32.mrb[0].mxu0
    %1066 = vmatprep.mubr.bf16.mxu0 %v719
    %1067 = vmatmul.mubr.bf16.gmra.mrb[0].mxu0 %v718
    %v1068 = vpop.f32.mrb[0].mxu0
    %v1069 = vadd.f32 0.0, %v1068
    %v1070 = vpop.f32.mrb[0].mxu0
    %v1071 = vpop.f32.mrb[0].mxu0
    %v1072 = vadd.f32 0.0, %v1071
    %v1073 = vpop.f32.mrb[0].mxu0
    %1074 = vdwg.mxu0
    %1075 = vmatprep.subr.bf16.mxu0 0
    %1076 = vmatpush1.bf16.msra.mxu0 %v930
    %1077 = vmatprep.subr.bf16.mxu0 0
    %1078 = vmatpush1.bf16.msra.mxu0 %v931
    %1079 = vmatprep.subr.bf16.mxu0 0
    %1080 = vmatpush1.bf16.msra.mxu0 %v932
    %1081 = vmatprep.subr.bf16.mxu0 0
    %1082 = vmatpush1.bf16.msra.mxu0 %v933
    %1083 = vmatprep.subr.bf16.mxu0 0
    %1084 = vmatpush1.bf16.msra.mxu0 %v934
    %1085 = vmatprep.subr.bf16.mxu0 0
    %1086 = vmatpush1.bf16.msra.mxu0 %v935
    %1087 = vmatprep.subr.bf16.mxu0 0
    %1088 = vmatpush1.bf16.msra.mxu0 %v936
    %1089 = vmatprep.subr.bf16.mxu0 0
    %1090 = vmatpush1.bf16.msra.mxu0 %v937
    %1091 = vmatprep.subr.bf16.mxu0 0
    %1092 = vmatpush1.bf16.msra.mxu0 %v938
    %1093 = vmatprep.subr.bf16.mxu0 0
    %1094 = vmatpush1.bf16.msra.mxu0 %v939
    %1095 = vmatprep.subr.bf16.mxu0 0
    %1096 = vmatpush1.bf16.msra.mxu0 %v940
    %1097 = vmatprep.subr.bf16.mxu0 0
    %1098 = vmatpush1.bf16.msra.mxu0 %v941
    %1099 = vmatprep.subr.bf16.mxu0 0
    %1100 = vmatpush1.bf16.msra.mxu0 %v942
    %1101 = vmatprep.subr.bf16.mxu0 0
    %1102 = vmatpush1.bf16.msra.mxu0 %v943
    %1103 = vmatprep.subr.bf16.mxu0 0
    %1104 = vmatpush1.bf16.msra.mxu0 %v944
    %1105 = vmatprep.subr.bf16.mxu0 0
    %1106 = vmatpush1.bf16.msra.mxu0 %v945
    %1107 = vmatprep.mubr.bf16.mxu0 %v693
    %1108 = vmatmul.mubr.bf16.gmra.mrb[0].mxu0 %v692
    %v1109 = vpop.f32.mrb[0].mxu0
    %v1110 = vadd.f32 %v1013, %v1109
    %v1111 = vpop.f32.mrb[0].mxu0
    %v1112 = vpop.f32.mrb[0].mxu0
    %v1113 = vadd.f32 %v1016, %v1112
    %v1114 = vpop.f32.mrb[0].mxu0
    %1115 = vmatprep.mubr.bf16.mxu0 %v697
    %1116 = vmatmul.mubr.bf16.gmra.mrb[0].mxu0 %v696
    %v1117 = vpop.f32.mrb[0].mxu0
    %v1118 = vadd.f32 %v1021, %v1117
    %v1119 = vpop.f32.mrb[0].mxu0
    %v1120 = vpop.f32.mrb[0].mxu0
    %v1121 = vadd.f32 %v1024, %v1120
    %v1122 = vpop.f32.mrb[0].mxu0
    %1123 = vmatprep.mubr.bf16.mxu0 %v701
    %1124 = vmatmul.mubr.bf16.gmra.mrb[0].mxu0 %v700
    %v1125 = vpop.f32.mrb[0].mxu0
    %v1126 = vadd.f32 %v1029, %v1125
    %v1127 = vpop.f32.mrb[0].mxu0
    %v1128 = vpop.f32.mrb[0].mxu0
    %v1129 = vadd.f32 %v1032, %v1128
    %v1130 = vpop.f32.mrb[0].mxu0
    %1131 = vmatprep.mubr.bf16.mxu0 %v705
    %1132 = vmatmul.mubr.bf16.gmra.mrb[0].mxu0 %v704
    %v1133 = vpop.f32.mrb[0].mxu0
    %v1134 = vadd.f32 %v1037, %v1133
    %v1135 = vpop.f32.mrb[0].mxu0
    %v1136 = vpop.f32.mrb[0].mxu0
    %v1137 = vadd.f32 %v1040, %v1136
    %v1138 = vpop.f32.mrb[0].mxu0
    %1139 = vmatprep.mubr.bf16.mxu0 %v709
    %1140 = vmatmul.mubr.bf16.gmra.mrb[0].mxu0 %v708
    %v1141 = vpop.f32.mrb[0].mxu0
    %v1142 = vadd.f32 %v1045, %v1141
    %v1143 = vpop.f32.mrb[0].mxu0
    %v1144 = vpop.f32.mrb[0].mxu0
    %v1145 = vadd.f32 %v1048, %v1144
    %v1146 = vpop.f32.mrb[0].mxu0
    %1147 = vmatprep.mubr.bf16.mxu0 %v713
    %1148 = vmatmul.mubr.bf16.gmra.mrb[0].mxu0 %v712
    %v1149 = vpop.f32.mrb[0].mxu0
    %v1150 = vadd.f32 %v1053, %v1149
    %v1151 = vpop.f32.mrb[0].mxu0
    %v1152 = vpop.f32.mrb[0].mxu0
    %v1153 = vadd.f32 %v1056, %v1152
    %v1154 = vpop.f32.mrb[0].mxu0
    %1155 = vmatprep.mubr.bf16.mxu0 %v717
    %1156 = vmatmul.mubr.bf16.gmra.mrb[0].mxu0 %v716
    %v1157 = vpop.f32.mrb[0].mxu0
    %v1158 = vadd.f32 %v1061, %v1157
    %v1159 = vpop.f32.mrb[0].mxu0
    %v1160 = vpop.f32.mrb[0].mxu0
    %v1161 = vadd.f32 %v1064, %v1160
    %v1162 = vpop.f32.mrb[0].mxu0
    %1163 = vmatprep.mubr.bf16.mxu0 %v721
    %1164 = vmatmul.mubr.bf16.gmra.mrb[0].mxu0 %v720
    %v1165 = vpop.f32.mrb[0].mxu0
    %v1166 = vadd.f32 %v1069, %v1165
    %v1167 = vpop.f32.mrb[0].mxu0
    %v1168 = vpop.f32.mrb[0].mxu0
    %v1169 = vadd.f32 %v1072, %v1168
    %v1170 = vpop.f32.mrb[0].mxu0
    %1171 = vdwg.mxu0
    %v1172 = vld [vmem:[#allocation7] sm:$0xf]
    %v1173 = vld [vmem:[#allocation7 + $0x4] sm:$0xf]
    %v1174 = vld [vmem:[#allocation7 + $0x8] sm:$0xf]
    %v1175 = vld [vmem:[#allocation7 + $0xc] sm:$0xf]
    %v1176 = vld [vmem:[#allocation7 + $0x10] sm:$0xf]
    %v1177 = vld [vmem:[#allocation7 + $0x14] sm:$0xf]
    %v1178 = vld [vmem:[#allocation7 + $0x18] sm:$0xf]
    %v1179 = vld [vmem:[#allocation7 + $0x1c] sm:$0xf]
    %v1180 = vld [vmem:[#allocation7 + $0x20] sm:$0xf]
    %v1181 = vld [vmem:[#allocation7 + $0x24] sm:$0xf]
    %v1182 = vld [vmem:[#allocation7 + $0x28] sm:$0xf]
    %v1183 = vld [vmem:[#allocation7 + $0x2c] sm:$0xf]
    %v1184 = vld [vmem:[#allocation7 + $0x30] sm:$0xf]
    %v1185 = vld [vmem:[#allocation7 + $0x34] sm:$0xf]
    %v1186 = vld [vmem:[#allocation7 + $0x38] sm:$0xf]
    %v1187 = vld [vmem:[#allocation7 + $0x3c] sm:$0xf]
    %v1204 = vunpack.c.l.b16 %v1172
    %v1205 = vunpack.c.l.b16 %v1173
    %v1206 = vunpack.c.l.b16 %v1174
    %v1207 = vunpack.c.l.b16 %v1175
    %v1208 = vunpack.c.l.b16 %v1176
    %v1209 = vunpack.c.l.b16 %v1177
    %v1210 = vunpack.c.l.b16 %v1178
    %v1211 = vunpack.c.l.b16 %v1179
    %v1212 = vunpack.c.l.b16 %v1180
    %v1213 = vunpack.c.l.b16 %v1181
    %v1214 = vunpack.c.l.b16 %v1182
    %v1215 = vunpack.c.l.b16 %v1183
    %v1216 = vunpack.c.l.b16 %v1184
    %v1217 = vunpack.c.l.b16 %v1185
    %v1218 = vunpack.c.l.b16 %v1186
    %v1219 = vunpack.c.l.b16 %v1187
    %v1220 = vpack.c.b16 %v1205, %v1204
    %v1221 = vpack.c.b16 %v1207, %v1206
    %v1222 = vpack.c.b16 %v1209, %v1208
    %v1223 = vpack.c.b16 %v1211, %v1210
    %v1224 = vpack.c.b16 %v1213, %v1212
    %v1225 = vpack.c.b16 %v1215, %v1214
    %v1226 = vpack.c.b16 %v1217, %v1216
    %v1227 = vpack.c.b16 %v1219, %v1218
    %1236 = vmatprep.subr.bf16.mxu0 0
    %1237 = vmatpush1.bf16.msra.mxu0 %v1220
    %1238 = vmatprep.subr.bf16.mxu0 0
    %1239 = vmatpush1.bf16.msra.mxu0 %v1221
    %1240 = vmatprep.subr.bf16.mxu0 0
    %1241 = vmatpush1.bf16.msra.mxu0 %v1222
    %1242 = vmatprep.subr.bf16.mxu0 0
    %1243 = vmatpush1.bf16.msra.mxu0 %v1223
    %1244 = vmatprep.subr.bf16.mxu0 0
    %1245 = vmatpush1.bf16.msra.mxu0 %v1224
    %1246 = vmatprep.subr.bf16.mxu0 0
    %1247 = vmatpush1.bf16.msra.mxu0 %v1225
    %1248 = vmatprep.subr.bf16.mxu0 0
    %1249 = vmatpush1.bf16.msra.mxu0 %v1226
    %1250 = vmatprep.subr.bf16.mxu0 0
    %1251 = vmatpush1.bf16.msra.mxu0 %v1227
    %1252 = vmatprep.subr.bf16.mxu0 0
    %1253 = vmatpush1.bf16.msra.mxu0 0
    %1254 = vmatprep.subr.bf16.mxu0 0
    %1255 = vmatpush1.bf16.msra.mxu0 0
    %1256 = vmatprep.subr.bf16.mxu0 0
    %1257 = vmatpush1.bf16.msra.mxu0 0
    %1258 = vmatprep.subr.bf16.mxu0 0
    %1259 = vmatpush1.bf16.msra.mxu0 0
    %1260 = vmatprep.subr.bf16.mxu0 0
    %1261 = vmatpush1.bf16.msra.mxu0 0
    %1262 = vmatprep.subr.bf16.mxu0 0
    %1263 = vmatpush1.bf16.msra.mxu0 0
    %1264 = vmatprep.subr.bf16.mxu0 0
    %1265 = vmatpush1.bf16.msra.mxu0 0
    %1266 = vmatprep.subr.bf16.mxu0 0
    %1267 = vmatpush1.bf16.msra.mxu0 0
    %1268 = vmatprep.mubr.bf16.mxu0 0
    %1269 = vmatmul.mubr.bf16.gmra.mrb[0].mxu0 %v160
    %v1270 = vpop.f32.mrb[0].mxu0
    %v1271 = vadd.f32 0.0, %v1270
    %v1272 = vpop.f32.mrb[0].mxu0
    %v1273 = vpop.f32.mrb[0].mxu0
    %v1274 = vadd.f32 0.0, %v1273
    %v1275 = vpop.f32.mrb[0].mxu0
    %1276 = vmatprep.mubr.bf16.mxu0 0
    %1277 = vmatmul.mubr.bf16.gmra.mrb[0].mxu0 %v161
    %v1278 = vpop.f32.mrb[0].mxu0
    %v1279 = vadd.f32 0.0, %v1278
    %v1280 = vpop.f32.mrb[0].mxu0
    %v1281 = vpop.f32.mrb[0].mxu0
    %v1282 = vadd.f32 0.0, %v1281
    %v1283 = vpop.f32.mrb[0].mxu0
    %1284 = vmatprep.mubr.bf16.mxu0 0
    %1285 = vmatmul.mubr.bf16.gmra.mrb[0].mxu0 %v162
    %v1286 = vpop.f32.mrb[0].mxu0
    %v1287 = vadd.f32 0.0, %v1286
    %v1288 = vpop.f32.mrb[0].mxu0
    %v1289 = vpop.f32.mrb[0].mxu0
    %v1290 = vadd.f32 0.0, %v1289
    %v1291 = vpop.f32.mrb[0].mxu0
    %1292 = vmatprep.mubr.bf16.mxu0 0
    %1293 = vmatmul.mubr.bf16.gmra.mrb[0].mxu0 %v163
    %v1294 = vpop.f32.mrb[0].mxu0
    %v1295 = vadd.f32 0.0, %v1294
    %v1296 = vpop.f32.mrb[0].mxu0
    %v1297 = vpop.f32.mrb[0].mxu0
    %v1298 = vadd.f32 0.0, %v1297
    %v1299 = vpop.f32.mrb[0].mxu0
    %1300 = vmatprep.mubr.bf16.mxu0 0
    %1301 = vmatmul.mubr.bf16.gmra.mrb[0].mxu0 %v164
    %v1302 = vpop.f32.mrb[0].mxu0
    %v1303 = vadd.f32 0.0, %v1302
    %v1304 = vpop.f32.mrb[0].mxu0
    %v1305 = vpop.f32.mrb[0].mxu0
    %v1306 = vadd.f32 0.0, %v1305
    %v1307 = vpop.f32.mrb[0].mxu0
    %1308 = vmatprep.mubr.bf16.mxu0 0
    %1309 = vmatmul.mubr.bf16.gmra.mrb[0].mxu0 %v165
    %v1310 = vpop.f32.mrb[0].mxu0
    %v1311 = vadd.f32 0.0, %v1310
    %v1312 = vpop.f32.mrb[0].mxu0
    %v1313 = vpop.f32.mrb[0].mxu0
    %v1314 = vadd.f32 0.0, %v1313
    %v1315 = vpop.f32.mrb[0].mxu0
    %1316 = vmatprep.mubr.bf16.mxu0 0
    %1317 = vmatmul.mubr.bf16.gmra.mrb[0].mxu0 %v166
    %v1318 = vpop.f32.mrb[0].mxu0
    %v1319 = vadd.f32 0.0, %v1318
    %v1320 = vpop.f32.mrb[0].mxu0
    %v1321 = vpop.f32.mrb[0].mxu0
    %v1322 = vadd.f32 0.0, %v1321
    %v1323 = vpop.f32.mrb[0].mxu0
    %1324 = vmatprep.mubr.bf16.mxu0 0
    %1325 = vmatmul.mubr.bf16.gmra.mrb[0].mxu0 %v167
    %v1326 = vpop.f32.mrb[0].mxu0
    %v1327 = vadd.f32 0.0, %v1326
    %v1328 = vpop.f32.mrb[0].mxu0
    %v1329 = vpop.f32.mrb[0].mxu0
    %v1330 = vadd.f32 0.0, %v1329
    %v1331 = vpop.f32.mrb[0].mxu0
    %1332 = vdwg.mxu0
    %v1333 = vxor.u32 %v1271, 2147483648
    %v1334 = vxor.u32 %v1274, 2147483648
    %v1335 = vxor.u32 %v1279, 2147483648
    %v1336 = vxor.u32 %v1282, 2147483648
    %v1337 = vxor.u32 %v1287, 2147483648
    %v1338 = vxor.u32 %v1290, 2147483648
    %v1339 = vxor.u32 %v1295, 2147483648
    %v1340 = vxor.u32 %v1298, 2147483648
    %v1341 = vxor.u32 %v1303, 2147483648
    %v1342 = vxor.u32 %v1306, 2147483648
    %v1343 = vxor.u32 %v1311, 2147483648
    %v1344 = vxor.u32 %v1314, 2147483648
    %v1345 = vxor.u32 %v1319, 2147483648
    %v1346 = vxor.u32 %v1322, 2147483648
    %v1347 = vxor.u32 %v1327, 2147483648
    %v1348 = vxor.u32 %v1330, 2147483648
    %v1349 = vmul.f32 %v1333, 1.442695
    %v1350 = vpow.pop %v1349
    %v1351 = vmul.f32 %v1334, 1.442695
    %v1352 = vpow.pop %v1351
    %v1353 = vmul.f32 %v1335, 1.442695
    %v1354 = vpow.pop %v1353
    %v1355 = vmul.f32 %v1336, 1.442695
    %v1356 = vpow.pop %v1355
    %v1357 = vmul.f32 %v1337, 1.442695
    %v1358 = vpow.pop %v1357
    %v1359 = vmul.f32 %v1338, 1.442695
    %v1360 = vpow.pop %v1359
    %v1361 = vmul.f32 %v1339, 1.442695
    %v1362 = vpow.pop %v1361
    %v1363 = vmul.f32 %v1340, 1.442695
    %v1364 = vpow.pop %v1363
    %v1365 = vmul.f32 %v1341, 1.442695
    %v1366 = vpow.pop %v1365
    %v1367 = vmul.f32 %v1342, 1.442695
    %v1368 = vpow.pop %v1367
    %v1369 = vmul.f32 %v1343, 1.442695
    %v1370 = vpow.pop %v1369
    %v1371 = vmul.f32 %v1344, 1.442695
    %v1372 = vpow.pop %v1371
    %v1373 = vmul.f32 %v1345, 1.442695
    %v1374 = vpow.pop %v1373
    %v1375 = vmul.f32 %v1346, 1.442695
    %v1376 = vpow.pop %v1375
    %v1377 = vmul.f32 %v1347, 1.442695
    %v1378 = vpow.pop %v1377
    %v1379 = vmul.f32 %v1348, 1.442695
    %v1380 = vpow.pop %v1379
    %v1381 = vadd.f32 %v1350, 1.0
    %v1382 = vadd.f32 %v1352, 1.0
    %v1383 = vadd.f32 %v1354, 1.0
    %v1384 = vadd.f32 %v1356, 1.0
    %v1385 = vadd.f32 %v1358, 1.0
    %v1386 = vadd.f32 %v1360, 1.0
    %v1387 = vadd.f32 %v1362, 1.0
    %v1388 = vadd.f32 %v1364, 1.0
    %v1389 = vadd.f32 %v1366, 1.0
    %v1390 = vadd.f32 %v1368, 1.0
    %v1391 = vadd.f32 %v1370, 1.0
    %v1392 = vadd.f32 %v1372, 1.0
    %v1393 = vadd.f32 %v1374, 1.0
    %v1394 = vadd.f32 %v1376, 1.0
    %v1395 = vadd.f32 %v1378, 1.0
    %v1396 = vadd.f32 %v1380, 1.0
    %v1397 = vrcp.pop %v1381
    %v1398 = vmul.f32 1.0, %v1397
    %v1399 = vrcp.pop %v1382
    %v1400 = vmul.f32 1.0, %v1399
    %v1401 = vrcp.pop %v1383
    %v1402 = vmul.f32 1.0, %v1401
    %v1403 = vrcp.pop %v1384
    %v1404 = vmul.f32 1.0, %v1403
    %v1405 = vrcp.pop %v1385
    %v1406 = vmul.f32 1.0, %v1405
    %v1407 = vrcp.pop %v1386
    %v1408 = vmul.f32 1.0, %v1407
    %v1409 = vrcp.pop %v1387
    %v1410 = vmul.f32 1.0, %v1409
    %v1411 = vrcp.pop %v1388
    %v1412 = vmul.f32 1.0, %v1411
    %v1413 = vrcp.pop %v1389
    %v1414 = vmul.f32 1.0, %v1413
    %v1415 = vrcp.pop %v1390
    %v1416 = vmul.f32 1.0, %v1415
    %v1417 = vrcp.pop %v1391
    %v1418 = vmul.f32 1.0, %v1417
    %v1419 = vrcp.pop %v1392
    %v1420 = vmul.f32 1.0, %v1419
    %v1421 = vrcp.pop %v1393
    %v1422 = vmul.f32 1.0, %v1421
    %v1423 = vrcp.pop %v1394
    %v1424 = vmul.f32 1.0, %v1423
    %v1425 = vrcp.pop %v1395
    %v1426 = vmul.f32 1.0, %v1425
    %v1427 = vrcp.pop %v1396
    %v1428 = vmul.f32 1.0, %v1427
    %v1429 = vmul.f32 %v1398, %v1110
    %v1430 = vmul.f32 %v1400, %v1113
    %v1431 = vmul.f32 %v1402, %v1118
    %v1432 = vmul.f32 %v1404, %v1121
    %v1433 = vmul.f32 %v1406, %v1126
    %v1434 = vmul.f32 %v1408, %v1129
    %v1435 = vmul.f32 %v1410, %v1134
    %v1436 = vmul.f32 %v1412, %v1137
    %v1437 = vmul.f32 %v1414, %v1142
    %v1438 = vmul.f32 %v1416, %v1145
    %v1439 = vmul.f32 %v1418, %v1150
    %v1440 = vmul.f32 %v1420, %v1153
    %v1441 = vmul.f32 %v1422, %v1158
    %v1442 = vmul.f32 %v1424, %v1161
    %v1443 = vmul.f32 %v1426, %v1166
    %v1444 = vmul.f32 %v1428, %v1169
    %1445 = vst [vmem:[#allocation10] sm:$0xff] %v1429
    %1446 = vst [vmem:[#allocation10 + $0x8] sm:$0xff] %v1430
    %1447 = vst [vmem:[#allocation10 + $0x10] sm:$0xff] %v1431
    %1448 = vst [vmem:[#allocation10 + $0x18] sm:$0xff] %v1432
    %1449 = vst [vmem:[#allocation10 + $0x20] sm:$0xff] %v1433
    %1450 = vst [vmem:[#allocation10 + $0x28] sm:$0xff] %v1434
    %1451 = vst [vmem:[#allocation10 + $0x30] sm:$0xff] %v1435
    %1452 = vst [vmem:[#allocation10 + $0x38] sm:$0xff] %v1436
    %1453 = vst [vmem:[#allocation10 + $0x40] sm:$0xff] %v1437
    %1454 = vst [vmem:[#allocation10 + $0x48] sm:$0xff] %v1438
    %1455 = vst [vmem:[#allocation10 + $0x50] sm:$0xff] %v1439
    %1456 = vst [vmem:[#allocation10 + $0x58] sm:$0xff] %v1440
    %1457 = vst [vmem:[#allocation10 + $0x60] sm:$0xff] %v1441
    %1458 = vst [vmem:[#allocation10 + $0x68] sm:$0xff] %v1442
    %1459 = vst [vmem:[#allocation10 + $0x70] sm:$0xff] %v1443
    %1460 = vst [vmem:[#allocation10 + $0x78] sm:$0xff] %v1444
    // Predicated region
    $region42: #{tpu_custom_call.1} parent=1 // pred_check
      _
    $region43: #{tpu_custom_call.1} parent=1 // pred_check_branch
      %1462 = sbr.rel (0) target = $region45
    $region44: #{tpu_custom_call.1} parent=1 // pred_region
      %s1464 = ssub.s32 2048, 2048
      %1465 = vsyncadd [#allocation4], %s1464
      %s1466 = sshll.u32 [#allocation10], 4
      %s1467 = int_to_ptr.vmem [resolvable:$true] %s1466
      %1472 = dma.vmem_to_hbm [thread:$0]  %s1467, 2048, %s6, [#allocation4], 128, 128, 8
    $region45: #{tpu_custom_call.1} parent=1 // pred_fallthru
      _
    // Predicated region
    $region46: #{tpu_custom_call.1} parent=1 // pred_check
      _
    $region47: #{tpu_custom_call.1} parent=1 // pred_check_branch
      %1474 = sbr.rel (0) target = $region49
    $region48: #{tpu_custom_call.1} parent=1 // pred_region
      %1475 = dma.done [#allocation4], 2048
    $region49: #{tpu_custom_call.1} parent=1 // pred_fallthru
      _
    %1476 = vsyncpa [#allocation3], 1
    %1477 = vsyncpa [#allocation6], 1
    %1478 = vsyncpa [#allocation9], 1
    %1479 = vsyncpa [#allocation4], 1

// kernel: tpu_custom_call.1
$region0: #{tpu_custom_call.1}
  #allocation0 [shape = 'u32[]', space=smem, size = 0x4, offset = 0x4, fixed_abs, tag = 'smem constant byte address 0x4 - core index']
  #allocation1 [shape = 'u32[144,128]{1,0:T(1,128)}', space=vmem, size = 0x12000, scoped, tag = 'internal scratch']
  %s0 = inlined_call_operand.hbm [shape: bf16[128,128], index: 0, kind: input, shape index: {}]
  %s1 = inlined_call_operand.hbm [shape: bf16[128,512], index: 1, kind: input, shape index: {}]
  %s2 = inlined_call_operand.hbm [shape: bf16[128,128], index: 2, kind: input, shape index: {}]
  %s3 = inlined_call_operand.hbm [shape: bf16[512,128], index: 3, kind: input, shape index: {}]
  %s4 = inlined_call_operand.vmem [shape: f32[1,512], index: 4, kind: input, shape index: {}]
  %s5 = inlined_call_operand.vmem [shape: f32[1,512], index: 5, kind: input, shape index: {}]
  %s6 = inlined_call_operand.hbm [shape: f32[128,128], index: 6, kind: output, shape index: {}]
  %s7 = sld [smem:[#allocation0]]
  $region50: #{tpu_custom_call.1} parent=0
    _
  %s9 = ssub.s32 1, %s7
  %s10 = scalar_select 0, %s9, %s7
  $region1: #{tpu_custom_call.1} parent=0
    #allocation2 [shape = 'u8[32768]{0}', space=vmem, size = 0x8000, scoped, tag = 'input window, operand 0, single buffered']
    #allocation3 [shape = 's32[1]{0}', space=sflag, size = 0x4, scoped, tag = 'scoped memory for tpu_custom_call.1']
    #allocation4 [shape = 's32[1]{0}', space=sflag, size = 0x4, scoped, tag = 'scoped memory for tpu_custom_call.1']
    #allocation5 [shape = 'u8[131072]{0}', space=vmem, size = 0x20000, scoped, tag = 'input window, operand 1, single buffered']
    #allocation6 [shape = 's32[1]{0}', space=sflag, size = 0x4, scoped, tag = 'scoped memory for tpu_custom_call.1']
    #allocation7 [shape = 'u8[32768]{0}', space=vmem, size = 0x8000, scoped, tag = 'input window, operand 2, single buffered']
    #allocation8 [shape = 'u8[131072]{0}', space=vmem, size = 0x20000, scoped, tag = 'input window, operand 3, single buffered']
    #allocation9 [shape = 's32[1]{0}', space=sflag, size = 0x4, scoped, tag = 'scoped memory for tpu_custom_call.1']
    #allocation10 [shape = 'u8[65536]{0}', space=vmem, size = 0x10000, scoped, tag = 'output window, operand 0, single buffered']
    %11 = vsyncpa [#allocation3], 0
    %12 = vsyncpa [#allocation6], 0
    %13 = vsyncpa [#allocation9], 0
    %14 = vsyncpa [#allocation4], 0
    // Predicated region
    $region2: #{tpu_custom_call.1} parent=1 // pred_check
      _
    $region3: #{tpu_custom_call.1} parent=1 // pred_check_branch
      %16 = sbr.rel (0) target = $region5
    $region4: #{tpu_custom_call.1} parent=1 // pred_region
      %s18 = ssub.s32 1024, 1024
      %19 = vsyncadd [#allocation3], %s18
      %s20 = sshll.u32 [#allocation2], 4
      %s21 = int_to_ptr.vmem [resolvable:$true] %s20
      %26 = dma.hbm_to_vmem [thread:$0]  %s0, 1024, %s21, [#allocation3], 64, 64, 4
    $region5: #{tpu_custom_call.1} parent=1 // pred_fallthru
      _
    // Predicated region
    $region6: #{tpu_custom_call.1} parent=1 // pred_check
      _
    $region7: #{tpu_custom_call.1} parent=1 // pred_check_branch
      %28 = sbr.rel (0) target = $region9
    $region8: #{tpu_custom_call.1} parent=1 // pred_region
      %s30 = ssub.s32 4096, 4096
      %31 = vsyncadd [#allocation6], %s30
      %s32 = sshll.u32 [#allocation5], 4
      %s33 = int_to_ptr.vmem [resolvable:$true] %s32
      %38 = dma.hbm_to_vmem [thread:$0]  %s1, 4096, %s33, [#allocation6], 256, 256, 16
    $region9: #{tpu_custom_call.1} parent=1 // pred_fallthru
      _
    // Predicated region
    $region10: #{tpu_custom_call.1} parent=1 // pred_check
      _
    $region11: #{tpu_custom_call.1} parent=1 // pred_check_branch
      %40 = sbr.rel (0) target = $region13
    $region12: #{tpu_custom_call.1} parent=1 // pred_region
      %s42 = ssub.s32 1024, 1024
      %43 = vsyncadd [#allocation6], %s42
      %s44 = sshll.u32 [#allocation7], 4
      %s45 = int_to_ptr.vmem [resolvable:$true] %s44
      %50 = dma.hbm_to_vmem [thread:$0]  %s2, 1024, %s45, [#allocation6], 64, 64, 4
    $region13: #{tpu_custom_call.1} parent=1 // pred_fallthru
      _
    // Predicated region
    $region14: #{tpu_custom_call.1} parent=1 // pred_check
      _
    $region15: #{tpu_custom_call.1} parent=1 // pred_check_branch
      %52 = sbr.rel (0) target = $region17
    $region16: #{tpu_custom_call.1} parent=1 // pred_region
      %s54 = ssub.s32 4096, 4096
      %55 = vsyncadd [#allocation9], %s54
      %s56 = sshll.u32 [#allocation8], 4
      %s57 = int_to_ptr.vmem [resolvable:$true] %s56
      %62 = dma.hbm_to_vmem [thread:$0]  %s3, 4096, %s57, [#allocation9], 64, 64, 4
    $region17: #{tpu_custom_call.1} parent=1 // pred_fallthru
      _
    // Predicated region
    $region18: #{tpu_custom_call.1} parent=1 // pred_check
      _
    $region19: #{tpu_custom_call.1} parent=1 // pred_check_branch
      %64 = sbr.rel (0) target = $region21
    $region20: #{tpu_custom_call.1} parent=1 // pred_region
      _
    $region21: #{tpu_custom_call.1} parent=1 // pred_fallthru
      _
    // Predicated region
    $region22: #{tpu_custom_call.1} parent=1 // pred_check
      _
    $region23: #{tpu_custom_call.1} parent=1 // pred_check_branch
      %66 = sbr.rel (0) target = $region25
    $region24: #{tpu_custom_call.1} parent=1 // pred_region
      _
    $region25: #{tpu_custom_call.1} parent=1 // pred_fallthru
      _
    // Predicated region
    $region26: #{tpu_custom_call.1} parent=1 // pred_check
      _
    $region27: #{tpu_custom_call.1} parent=1 // pred_check_branch
      %68 = sbr.rel (0) target = $region29
    $region28: #{tpu_custom_call.1} parent=1 // pred_region
      %69 = dma.done [#allocation3], 1024
    $region29: #{tpu_custom_call.1} parent=1 // pred_fallthru
      _
    // Predicated region
    $region30: #{tpu_custom_call.1} parent=1 // pred_check
      _
    $region31: #{tpu_custom_call.1} parent=1 // pred_check_branch
      %71 = sbr.rel (0) target = $region33
    $region32: #{tpu_custom_call.1} parent=1 // pred_region
      %72 = dma.done [#allocation6], 4096
    $region33: #{tpu_custom_call.1} parent=1 // pred_fallthru
      _
    // Predicated region
    $region34: #{tpu_custom_call.1} parent=1 // pred_check
      _
    $region35: #{tpu_custom_call.1} parent=1 // pred_check_branch
      %74 = sbr.rel (0) target = $region37
    $region36: #{tpu_custom_call.1} parent=1 // pred_region
      %75 = dma.done [#allocation6], 1024
    $region37: #{tpu_custom_call.1} parent=1 // pred_fallthru
      _
    // Predicated region
    $region38: #{tpu_custom_call.1} parent=1 // pred_check
      _
    $region39: #{tpu_custom_call.1} parent=1 // pred_check_branch
      %77 = sbr.rel (0) target = $region41
    $region40: #{tpu_custom_call.1} parent=1 // pred_region
      %78 = dma.done [#allocation9], 4096
    $region41: #{tpu_custom_call.1} parent=1 // pred_fallthru
      _
    %v80 = vld [vmem:[#allocation2] sm:$0xf]
    %v81 = vld [vmem:[#allocation2 + $0x4] sm:$0xf]
    %v82 = vld [vmem:[#allocation2 + $0x8] sm:$0xf]
    %v83 = vld [vmem:[#allocation2 + $0xc] sm:$0xf]
    %v84 = vld [vmem:[#allocation2 + $0x10] sm:$0xf]
    %v85 = vld [vmem:[#allocation2 + $0x14] sm:$0xf]
    %v86 = vld [vmem:[#allocation2 + $0x18] sm:$0xf]
    %v87 = vld [vmem:[#allocation2 + $0x1c] sm:$0xf]
    %v88 = vld [vmem:[#allocation2 + $0x20] sm:$0xf]
    %v89 = vld [vmem:[#allocation2 + $0x24] sm:$0xf]
    %v90 = vld [vmem:[#allocation2 + $0x28] sm:$0xf]
    %v91 = vld [vmem:[#allocation2 + $0x2c] sm:$0xf]
    %v92 = vld [vmem:[#allocation2 + $0x30] sm:$0xf]
    %v93 = vld [vmem:[#allocation2 + $0x34] sm:$0xf]
    %v94 = vld [vmem:[#allocation2 + $0x38] sm:$0xf]
    %v95 = vld [vmem:[#allocation2 + $0x3c] sm:$0xf]
    %v96 = vld [vmem:[#allocation5] sm:$0xff]
    %v97 = vld [vmem:[#allocation5 + $0x8] sm:$0xff]
    %v98 = vld [vmem:[#allocation5 + $0x10] sm:$0xff]
    %v99 = vld [vmem:[#allocation5 + $0x18] sm:$0xff]
    %v100 = vld [vmem:[#allocation5 + $0x20] sm:$0xff]
    %v101 = vld [vmem:[#allocation5 + $0x28] sm:$0xff]
    %v102 = vld [vmem:[#allocation5 + $0x30] sm:$0xff]
    %v103 = vld [vmem:[#allocation5 + $0x38] sm:$0xff]
    %v104 = vld [vmem:[#allocation5 + $0x40] sm:$0xff]
    %v105 = vld [vmem:[#allocation5 + $0x48] sm:$0xff]
    %v106 = vld [vmem:[#allocation5 + $0x50] sm:$0xff]
    %v107 = vld [vmem:[#allocation5 + $0x58] sm:$0xff]
    %v108 = vld [vmem:[#allocation5 + $0x60] sm:$0xff]
    %v109 = vld [vmem:[#allocation5 + $0x68] sm:$0xff]
    %v110 = vld [vmem:[#allocation5 + $0x70] sm:$0xff]
    %v111 = vld [vmem:[#allocation5 + $0x78] sm:$0xff]
    %v112 = vld [vmem:[#allocation5 + $0x80] sm:$0xff]
    %v113 = vld [vmem:[#allocation5 + $0x88] sm:$0xff]
    %v114 = vld [vmem:[#allocation5 + $0x90] sm:$0xff]
    %v115 = vld [vmem:[#allocation5 + $0x98] sm:$0xff]
    %v116 = vld [vmem:[#allocation5 + $0xa0] sm:$0xff]
    %v117 = vld [vmem:[#allocation5 + $0xa8] sm:$0xff]
    %v118 = vld [vmem:[#allocation5 + $0xb0] sm:$0xff]
    %v119 = vld [vmem:[#allocation5 + $0xb8] sm:$0xff]
    %v120 = vld [vmem:[#allocation5 + $0xc0] sm:$0xff]
    %v121 = vld [vmem:[#allocation5 + $0xc8] sm:$0xff]
    %v122 = vld [vmem:[#allocation5 + $0xd0] sm:$0xff]
    %v123 = vld [vmem:[#allocation5 + $0xd8] sm:$0xff]
    %v124 = vld [vmem:[#allocation5 + $0xe0] sm:$0xff]
    %v125 = vld [vmem:[#allocation5 + $0xe8] sm:$0xff]
    %v126 = vld [vmem:[#allocation5 + $0xf0] sm:$0xff]
    %v127 = vld [vmem:[#allocation5 + $0xf8] sm:$0xff]
    %v144 = vunpack.c.l.b16 %v80
    %v145 = vunpack.c.l.b16 %v81
    %v146 = vunpack.c.l.b16 %v82
    %v147 = vunpack.c.l.b16 %v83
    %v148 = vunpack.c.l.b16 %v84
    %v149 = vunpack.c.l.b16 %v85
    %v150 = vunpack.c.l.b16 %v86
    %v151 = vunpack.c.l.b16 %v87
    %v152 = vunpack.c.l.b16 %v88
    %v153 = vunpack.c.l.b16 %v89
    %v154 = vunpack.c.l.b16 %v90
    %v155 = vunpack.c.l.b16 %v91
    %v156 = vunpack.c.l.b16 %v92
    %v157 = vunpack.c.l.b16 %v93
    %v158 = vunpack.c.l.b16 %v94
    %v159 = vunpack.c.l.b16 %v95
    %v160 = vpack.c.b16 %v145, %v144
    %v161 = vpack.c.b16 %v147, %v146
    %v162 = vpack.c.b16 %v149, %v148
    %v163 = vpack.c.b16 %v151, %v150
    %v164 = vpack.c.b16 %v153, %v152
    %v165 = vpack.c.b16 %v155, %v154
    %v166 = vpack.c.b16 %v157, %v156
    %v167 = vpack.c.b16 %v159, %v158
    %v208 = vunpack.c.l.b16 %v96
    %v209 = vunpack.c.h.b16 %v96
    %v210 = vunpack.c.l.b16 %v97
    %v211 = vunpack.c.h.b16 %v97
    %v212 = vunpack.c.l.b16 %v98
    %v213 = vunpack.c.h.b16 %v98
    %v214 = vunpack.c.l.b16 %v99
    %v215 = vunpack.c.h.b16 %v99
    %v216 = vunpack.c.l.b16 %v100
    %v217 = vunpack.c.h.b16 %v100
    %v218 = vunpack.c.l.b16 %v101
    %v219 = vunpack.c.h.b16 %v101
    %v220 = vunpack.c.l.b16 %v102
    %v221 = vunpack.c.h.b16 %v102
    %v222 = vunpack.c.l.b16 %v103
    %v223 = vunpack.c.h.b16 %v103
    %v224 = vunpack.c.l.b16 %v104
    %v225 = vunpack.c.h.b16 %v104
    %v226 = vunpack.c.l.b16 %v105
    %v227 = vunpack.c.h.b16 %v105
    %v228 = vunpack.c.l.b16 %v106
    %v229 = vunpack.c.h.b16 %v106
    %v230 = vunpack.c.l.b16 %v107
    %v231 = vunpack.c.h.b16 %v107
    %v232 = vunpack.c.l.b16 %v108
    %v233 = vunpack.c.h.b16 %v108
    %v234 = vunpack.c.l.b16 %v109
    %v235 = vunpack.c.h.b16 %v109
    %v236 = vunpack.c.l.b16 %v110
    %v237 = vunpack.c.h.b16 %v110
    %v238 = vunpack.c.l.b16 %v111
    %v239 = vunpack.c.h.b16 %v111
    %v240 = vunpack.c.l.b16 %v112
    %v241 = vunpack.c.h.b16 %v112
    %v242 = vunpack.c.l.b16 %v113
    %v243 = vunpack.c.h.b16 %v113
    %v244 = vunpack.c.l.b16 %v114
    %v245 = vunpack.c.h.b16 %v114
    %v246 = vunpack.c.l.b16 %v115
    %v247 = vunpack.c.h.b16 %v115
    %v248 = vunpack.c.l.b16 %v116
    %v249 = vunpack.c.h.b16 %v116
    %v250 = vunpack.c.l.b16 %v117
    %v251 = vunpack.c.h.b16 %v117
    %v252 = vunpack.c.l.b16 %v118
    %v253 = vunpack.c.h.b16 %v118
    %v254 = vunpack.c.l.b16 %v119
    %v255 = vunpack.c.h.b16 %v119
    %v256 = vunpack.c.l.b16 %v120
    %v257 = vunpack.c.h.b16 %v120
    %v258 = vunpack.c.l.b16 %v121
    %v259 = vunpack.c.h.b16 %v121
    %v260 = vunpack.c.l.b16 %v122
    %v261 = vunpack.c.h.b16 %v122
    %v262 = vunpack.c.l.b16 %v123
    %v263 = vunpack.c.h.b16 %v123
    %v264 = vunpack.c.l.b16 %v124
    %v265 = vunpack.c.h.b16 %v124
    %v266 = vunpack.c.l.b16 %v125
    %v267 = vunpack.c.h.b16 %v125
    %v268 = vunpack.c.l.b16 %v126
    %v269 = vunpack.c.h.b16 %v126
    %v270 = vunpack.c.l.b16 %v127
    %v271 = vunpack.c.h.b16 %v127
    %v272 = vpack.c.b16 %v212, %v208
    %v273 = vpack.c.b16 %v213, %v209
    %v274 = vpack.c.b16 %v214, %v210
    %v275 = vpack.c.b16 %v215, %v211
    %v276 = vpack.c.b16 %v220, %v216
    %v277 = vpack.c.b16 %v221, %v217
    %v278 = vpack.c.b16 %v222, %v218
    %v279 = vpack.c.b16 %v223, %v219
    %v280 = vpack.c.b16 %v228, %v224
    %v281 = vpack.c.b16 %v229, %v225
    %v282 = vpack.c.b16 %v230, %v226
    %v283 = vpack.c.b16 %v231, %v227
    %v284 = vpack.c.b16 %v236, %v232
    %v285 = vpack.c.b16 %v237, %v233
    %v286 = vpack.c.b16 %v238, %v234
    %v287 = vpack.c.b16 %v239, %v235
    %v288 = vpack.c.b16 %v244, %v240
    %v289 = vpack.c.b16 %v245, %v241
    %v290 = vpack.c.b16 %v246, %v242
    %v291 = vpack.c.b16 %v247, %v243
    %v292 = vpack.c.b16 %v252, %v248
    %v293 = vpack.c.b16 %v253, %v249
    %v294 = vpack.c.b16 %v254, %v250
    %v295 = vpack.c.b16 %v255, %v251
    %v296 = vpack.c.b16 %v260, %v256
    %v297 = vpack.c.b16 %v261, %v257
    %v298 = vpack.c.b16 %v262, %v258
    %v299 = vpack.c.b16 %v263, %v259
    %v300 = vpack.c.b16 %v268, %v264
    %v301 = vpack.c.b16 %v269, %v265
    %v302 = vpack.c.b16 %v270, %v266
    %v303 = vpack.c.b16 %v271, %v267
    %336 = vmatprep.subr.bf16.mxu0 %v273
    %337 = vmatpush1.bf16.msra.mxu0 %v272
    %338 = vmatprep.subr.bf16.mxu0 %v277
    %339 = vmatpush1.bf16.msra.mxu0 %v276
    %340 = vmatprep.subr.bf16.mxu0 %v281
    %341 = vmatpush1.bf16.msra.mxu0 %v280
    %342 = vmatprep.subr.bf16.mxu0 %v285
    %343 = vmatpush1.bf16.msra.mxu0 %v284
    %344 = vmatprep.subr.bf16.mxu0 %v289
    %345 = vmatpush1.bf16.msra.mxu0 %v288
    %346 = vmatprep.subr.bf16.mxu0 %v293
    %347 = vmatpush1.bf16.msra.mxu0 %v292
    %348 = vmatprep.subr.bf16.mxu0 %v297
    %349 = vmatpush1.bf16.msra.mxu0 %v296
    %350 = vmatprep.subr.bf16.mxu0 %v301
    %351 = vmatpush1.bf16.msra.mxu0 %v300
    %352 = vmatprep.subr.bf16.mxu0 0
    %353 = vmatpush1.bf16.msra.mxu0 0
    %354 = vmatprep.subr.bf16.mxu0 0
    %355 = vmatpush1.bf16.msra.mxu0 0
    %356 = vmatprep.subr.bf16.mxu0 0
    %357 = vmatpush1.bf16.msra.mxu0 0
    %358 = vmatprep.subr.bf16.mxu0 0
    %359 = vmatpush1.bf16.msra.mxu0 0
    %360 = vmatprep.subr.bf16.mxu0 0
    %361 = vmatpush1.bf16.msra.mxu0 0
    %362 = vmatprep.subr.bf16.mxu0 0
    %363 = vmatpush1.bf16.msra.mxu0 0
    %364 = vmatprep.subr.bf16.mxu0 0
    %365 = vmatpush1.bf16.msra.mxu0 0
    %366 = vmatprep.subr.bf16.mxu0 0
    %367 = vmatpush1.bf16.msra.mxu0 0
    %368 = vmatprep.mubr.bf16.mxu0 0
    %369 = vmatmul.mubr.bf16.gmra.mrb[0].mxu0 %v160
    %v370 = vpop.f32.mrb[0].mxu0
    %v371 = vadd.f32 0.0, %v370
    %v372 = vpop.f32.mrb[0].mxu0
    %v373 = vadd.f32 0.0, %v372
    %v374 = vpop.f32.mrb[0].mxu0
    %v375 = vadd.f32 0.0, %v374
    %v376 = vpop.f32.mrb[0].mxu0
    %v377 = vadd.f32 0.0, %v376
    %378 = vmatprep.mubr.bf16.mxu0 0
    %379 = vmatmul.mubr.bf16.gmra.mrb[0].mxu0 %v161
    %v380 = vpop.f32.mrb[0].mxu0
    %v381 = vadd.f32 0.0, %v380
    %v382 = vpop.f32.mrb[0].mxu0
    %v383 = vadd.f32 0.0, %v382
    %v384 = vpop.f32.mrb[0].mxu0
    %v385 = vadd.f32 0.0, %v384
    %v386 = vpop.f32.mrb[0].mxu0
    %v387 = vadd.f32 0.0, %v386
    %388 = vmatprep.mubr.bf16.mxu0 0
    %389 = vmatmul.mubr.bf16.gmra.mrb[0].mxu0 %v162
    %v390 = vpop.f32.mrb[0].mxu0
    %v391 = vadd.f32 0.0, %v390
    %v392 = vpop.f32.mrb[0].mxu0
    %v393 = vadd.f32 0.0, %v392
    %v394 = vpop.f32.mrb[0].mxu0
    %v395 = vadd.f32 0.0, %v394
    %v396 = vpop.f32.mrb[0].mxu0
    %v397 = vadd.f32 0.0, %v396
    %398 = vmatprep.mubr.bf16.mxu0 0
    %399 = vmatmul.mubr.bf16.gmra.mrb[0].mxu0 %v163
    %v400 = vpop.f32.mrb[0].mxu0
    %v401 = vadd.f32 0.0, %v400
    %v402 = vpop.f32.mrb[0].mxu0
    %v403 = vadd.f32 0.0, %v402
    %v404 = vpop.f32.mrb[0].mxu0
    %v405 = vadd.f32 0.0, %v404
    %v406 = vpop.f32.mrb[0].mxu0
    %v407 = vadd.f32 0.0, %v406
    %408 = vmatprep.mubr.bf16.mxu0 0
    %409 = vmatmul.mubr.bf16.gmra.mrb[0].mxu0 %v164
    %v410 = vpop.f32.mrb[0].mxu0
    %v411 = vadd.f32 0.0, %v410
    %v412 = vpop.f32.mrb[0].mxu0
    %v413 = vadd.f32 0.0, %v412
    %v414 = vpop.f32.mrb[0].mxu0
    %v415 = vadd.f32 0.0, %v414
    %v416 = vpop.f32.mrb[0].mxu0
    %v417 = vadd.f32 0.0, %v416
    %418 = vmatprep.mubr.bf16.mxu0 0
    %419 = vmatmul.mubr.bf16.gmra.mrb[0].mxu0 %v165
    %v420 = vpop.f32.mrb[0].mxu0
    %v421 = vadd.f32 0.0, %v420
    %v422 = vpop.f32.mrb[0].mxu0
    %v423 = vadd.f32 0.0, %v422
    %v424 = vpop.f32.mrb[0].mxu0
    %v425 = vadd.f32 0.0, %v424
    %v426 = vpop.f32.mrb[0].mxu0
    %v427 = vadd.f32 0.0, %v426
    %428 = vmatprep.mubr.bf16.mxu0 0
    %429 = vmatmul.mubr.bf16.gmra.mrb[0].mxu0 %v166
    %v430 = vpop.f32.mrb[0].mxu0
    %v431 = vadd.f32 0.0, %v430
    %v432 = vpop.f32.mrb[0].mxu0
    %v433 = vadd.f32 0.0, %v432
    %v434 = vpop.f32.mrb[0].mxu0
    %v435 = vadd.f32 0.0, %v434
    %v436 = vpop.f32.mrb[0].mxu0
    %v437 = vadd.f32 0.0, %v436
    %438 = vmatprep.mubr.bf16.mxu0 0
    %439 = vmatmul.mubr.bf16.gmra.mrb[0].mxu0 %v167
    %v440 = vpop.f32.mrb[0].mxu0
    %v441 = vadd.f32 0.0, %v440
    %v442 = vpop.f32.mrb[0].mxu0
    %v443 = vadd.f32 0.0, %v442
    %v444 = vpop.f32.mrb[0].mxu0
    %v445 = vadd.f32 0.0, %v444
    %v446 = vpop.f32.mrb[0].mxu0
    %v447 = vadd.f32 0.0, %v446
    %448 = vdwg.mxu0
    %449 = vmatprep.subr.bf16.mxu0 %v275
    %450 = vmatpush1.bf16.msra.mxu0 %v274
    %451 = vmatprep.subr.bf16.mxu0 %v279
    %452 = vmatpush1.bf16.msra.mxu0 %v278
    %453 = vmatprep.subr.bf16.mxu0 %v283
    %454 = vmatpush1.bf16.msra.mxu0 %v282
    %455 = vmatprep.subr.bf16.mxu0 %v287
    %456 = vmatpush1.bf16.msra.mxu0 %v286
    %457 = vmatprep.subr.bf16.mxu0 %v291
    %458 = vmatpush1.bf16.msra.mxu0 %v290
    %459 = vmatprep.subr.bf16.mxu0 %v295
    %460 = vmatpush1.bf16.msra.mxu0 %v294
    %461 = vmatprep.subr.bf16.mxu0 %v299
    %462 = vmatpush1.bf16.msra.mxu0 %v298
    %463 = vmatprep.subr.bf16.mxu0 %v303
    %464 = vmatpush1.bf16.msra.mxu0 %v302
    %465 = vmatprep.subr.bf16.mxu0 0
    %466 = vmatpush1.bf16.msra.mxu0 0
    %467 = vmatprep.subr.bf16.mxu0 0
    %468 = vmatpush1.bf16.msra.mxu0 0
    %469 = vmatprep.subr.bf16.mxu0 0
    %470 = vmatpush1.bf16.msra.mxu0 0
    %471 = vmatprep.subr.bf16.mxu0 0
    %472 = vmatpush1.bf16.msra.mxu0 0
    %473 = vmatprep.subr.bf16.mxu0 0
    %474 = vmatpush1.bf16.msra.mxu0 0
    %475 = vmatprep.subr.bf16.mxu0 0
    %476 = vmatpush1.bf16.msra.mxu0 0
    %477 = vmatprep.subr.bf16.mxu0 0
    %478 = vmatpush1.bf16.msra.mxu0 0
    %479 = vmatprep.subr.bf16.mxu0 0
    %480 = vmatpush1.bf16.msra.mxu0 0
    %481 = vmatprep.mubr.bf16.mxu0 0
    %482 = vmatmul.mubr.bf16.gmra.mrb[0].mxu0 %v160
    %v483 = vpop.f32.mrb[0].mxu0
    %v484 = vadd.f32 0.0, %v483
    %v485 = vpop.f32.mrb[0].mxu0
    %v486 = vadd.f32 0.0, %v485
    %v487 = vpop.f32.mrb[0].mxu0
    %v488 = vadd.f32 0.0, %v487
    %v489 = vpop.f32.mrb[0].mxu0
    %v490 = vadd.f32 0.0, %v489
    %491 = vmatprep.mubr.bf16.mxu0 0
    %492 = vmatmul.mubr.bf16.gmra.mrb[0].mxu0 %v161
    %v493 = vpop.f32.mrb[0].mxu0
    %v494 = vadd.f32 0.0, %v493
    %v495 = vpop.f32.mrb[0].mxu0
    %v496 = vadd.f32 0.0, %v495
    %v497 = vpop.f32.mrb[0].mxu0
    %v498 = vadd.f32 0.0, %v497
    %v499 = vpop.f32.mrb[0].mxu0
    %v500 = vadd.f32 0.0, %v499
    %501 = vmatprep.mubr.bf16.mxu0 0
    %502 = vmatmul.mubr.bf16.gmra.mrb[0].mxu0 %v162
    %v503 = vpop.f32.mrb[0].mxu0
    %v504 = vadd.f32 0.0, %v503
    %v505 = vpop.f32.mrb[0].mxu0
    %v506 = vadd.f32 0.0, %v505
    %v507 = vpop.f32.mrb[0].mxu0
    %v508 = vadd.f32 0.0, %v507
    %v509 = vpop.f32.mrb[0].mxu0
    %v510 = vadd.f32 0.0, %v509
    %511 = vmatprep.mubr.bf16.mxu0 0
    %512 = vmatmul.mubr.bf16.gmra.mrb[0].mxu0 %v163
    %v513 = vpop.f32.mrb[0].mxu0
    %v514 = vadd.f32 0.0, %v513
    %v515 = vpop.f32.mrb[0].mxu0
    %v516 = vadd.f32 0.0, %v515
    %v517 = vpop.f32.mrb[0].mxu0
    %v518 = vadd.f32 0.0, %v517
    %v519 = vpop.f32.mrb[0].mxu0
    %v520 = vadd.f32 0.0, %v519
    %521 = vmatprep.mubr.bf16.mxu0 0
    %522 = vmatmul.mubr.bf16.gmra.mrb[0].mxu0 %v164
    %v523 = vpop.f32.mrb[0].mxu0
    %v524 = vadd.f32 0.0, %v523
    %v525 = vpop.f32.mrb[0].mxu0
    %v526 = vadd.f32 0.0, %v525
    %v527 = vpop.f32.mrb[0].mxu0
    %v528 = vadd.f32 0.0, %v527
    %v529 = vpop.f32.mrb[0].mxu0
    %v530 = vadd.f32 0.0, %v529
    %531 = vmatprep.mubr.bf16.mxu0 0
    %532 = vmatmul.mubr.bf16.gmra.mrb[0].mxu0 %v165
    %v533 = vpop.f32.mrb[0].mxu0
    %v534 = vadd.f32 0.0, %v533
    %v535 = vpop.f32.mrb[0].mxu0
    %v536 = vadd.f32 0.0, %v535
    %v537 = vpop.f32.mrb[0].mxu0
    %v538 = vadd.f32 0.0, %v537
    %v539 = vpop.f32.mrb[0].mxu0
    %v540 = vadd.f32 0.0, %v539
    %541 = vmatprep.mubr.bf16.mxu0 0
    %542 = vmatmul.mubr.bf16.gmra.mrb[0].mxu0 %v166
    %v543 = vpop.f32.mrb[0].mxu0
    %v544 = vadd.f32 0.0, %v543
    %v545 = vpop.f32.mrb[0].mxu0
    %v546 = vadd.f32 0.0, %v545
    %v547 = vpop.f32.mrb[0].mxu0
    %v548 = vadd.f32 0.0, %v547
    %v549 = vpop.f32.mrb[0].mxu0
    %v550 = vadd.f32 0.0, %v549
    %551 = vmatprep.mubr.bf16.mxu0 0
    %552 = vmatmul.mubr.bf16.gmra.mrb[0].mxu0 %v167
    %v553 = vpop.f32.mrb[0].mxu0
    %v554 = vadd.f32 0.0, %v553
    %v555 = vpop.f32.mrb[0].mxu0
    %v556 = vadd.f32 0.0, %v555
    %v557 = vpop.f32.mrb[0].mxu0
    %v558 = vadd.f32 0.0, %v557
    %v559 = vpop.f32.mrb[0].mxu0
    %v560 = vadd.f32 0.0, %v559
    %561 = vdwg.mxu0
    %v562 = vmax.f32 %v371, 0.0
    %v563 = vmax.f32 %v373, 0.0
    %v564 = vmax.f32 %v484, 0.0
    %v565 = vmax.f32 %v486, 0.0
    %v566 = vmax.f32 %v375, 0.0
    %v567 = vmax.f32 %v377, 0.0
    %v568 = vmax.f32 %v488, 0.0
    %v569 = vmax.f32 %v490, 0.0
    %v570 = vmax.f32 %v381, 0.0
    %v571 = vmax.f32 %v383, 0.0
    %v572 = vmax.f32 %v494, 0.0
    %v573 = vmax.f32 %v496, 0.0
    %v574 = vmax.f32 %v385, 0.0
    %v575 = vmax.f32 %v387, 0.0
    %v576 = vmax.f32 %v498, 0.0
    %v577 = vmax.f32 %v500, 0.0
    %v578 = vmax.f32 %v391, 0.0
    %v579 = vmax.f32 %v393, 0.0
    %v580 = vmax.f32 %v504, 0.0
    %v581 = vmax.f32 %v506, 0.0
    %v582 = vmax.f32 %v395, 0.0
    %v583 = vmax.f32 %v397, 0.0
    %v584 = vmax.f32 %v508, 0.0
    %v585 = vmax.f32 %v510, 0.0
    %v586 = vmax.f32 %v401, 0.0
    %v587 = vmax.f32 %v403, 0.0
    %v588 = vmax.f32 %v514, 0.0
    %v589 = vmax.f32 %v516, 0.0
    %v590 = vmax.f32 %v405, 0.0
    %v591 = vmax.f32 %v407, 0.0
    %v592 = vmax.f32 %v518, 0.0
    %v593 = vmax.f32 %v520, 0.0
    %v594 = vmax.f32 %v411, 0.0
    %v595 = vmax.f32 %v413, 0.0
    %v596 = vmax.f32 %v524, 0.0
    %v597 = vmax.f32 %v526, 0.0
    %v598 = vmax.f32 %v415, 0.0
    %v599 = vmax.f32 %v417, 0.0
    %v600 = vmax.f32 %v528, 0.0
    %v601 = vmax.f32 %v530, 0.0
    %v602 = vmax.f32 %v421, 0.0
    %v603 = vmax.f32 %v423, 0.0
    %v604 = vmax.f32 %v534, 0.0
    %v605 = vmax.f32 %v536, 0.0
    %v606 = vmax.f32 %v425, 0.0
    %v607 = vmax.f32 %v427, 0.0
    %v608 = vmax.f32 %v538, 0.0
    %v609 = vmax.f32 %v540, 0.0
    %v610 = vmax.f32 %v431, 0.0
    %v611 = vmax.f32 %v433, 0.0
    %v612 = vmax.f32 %v544, 0.0
    %v613 = vmax.f32 %v546, 0.0
    %v614 = vmax.f32 %v435, 0.0
    %v615 = vmax.f32 %v437, 0.0
    %v616 = vmax.f32 %v548, 0.0
    %v617 = vmax.f32 %v550, 0.0
    %v618 = vmax.f32 %v441, 0.0
    %v619 = vmax.f32 %v443, 0.0
    %v620 = vmax.f32 %v554, 0.0
    %v621 = vmax.f32 %v556, 0.0
    %v622 = vmax.f32 %v445, 0.0
    %v623 = vmax.f32 %v447, 0.0
    %v624 = vmax.f32 %v558, 0.0
    %v625 = vmax.f32 %v560, 0.0
    %v626 = vmul.f32 %v562, %v562
    %v627 = vmul.f32 %v563, %v563
    %v628 = vmul.f32 %v564, %v564
    %v629 = vmul.f32 %v565, %v565
    %v630 = vmul.f32 %v566, %v566
    %v631 = vmul.f32 %v567, %v567
    %v632 = vmul.f32 %v568, %v568
    %v633 = vmul.f32 %v569, %v569
    %v634 = vmul.f32 %v570, %v570
    %v635 = vmul.f32 %v571, %v571
    %v636 = vmul.f32 %v572, %v572
    %v637 = vmul.f32 %v573, %v573
    %v638 = vmul.f32 %v574, %v574
    %v639 = vmul.f32 %v575, %v575
    %v640 = vmul.f32 %v576, %v576
    %v641 = vmul.f32 %v577, %v577
    %v642 = vmul.f32 %v578, %v578
    %v643 = vmul.f32 %v579, %v579
    %v644 = vmul.f32 %v580, %v580
    %v645 = vmul.f32 %v581, %v581
    %v646 = vmul.f32 %v582, %v582
    %v647 = vmul.f32 %v583, %v583
    %v648 = vmul.f32 %v584, %v584
    %v649 = vmul.f32 %v585, %v585
    %v650 = vmul.f32 %v586, %v586
    %v651 = vmul.f32 %v587, %v587
    %v652 = vmul.f32 %v588, %v588
    %v653 = vmul.f32 %v589, %v589
    %v654 = vmul.f32 %v590, %v590
    %v655 = vmul.f32 %v591, %v591
    %v656 = vmul.f32 %v592, %v592
    %v657 = vmul.f32 %v593, %v593
    %v658 = vmul.f32 %v594, %v594
    %v659 = vmul.f32 %v595, %v595
    %v660 = vmul.f32 %v596, %v596
    %v661 = vmul.f32 %v597, %v597
    %v662 = vmul.f32 %v598, %v598
    %v663 = vmul.f32 %v599, %v599
    %v664 = vmul.f32 %v600, %v600
    %v665 = vmul.f32 %v601, %v601
    %v666 = vmul.f32 %v602, %v602
    %v667 = vmul.f32 %v603, %v603
    %v668 = vmul.f32 %v604, %v604
    %v669 = vmul.f32 %v605, %v605
    %v670 = vmul.f32 %v606, %v606
    %v671 = vmul.f32 %v607, %v607
    %v672 = vmul.f32 %v608, %v608
    %v673 = vmul.f32 %v609, %v609
    %v674 = vmul.f32 %v610, %v610
    %v675 = vmul.f32 %v611, %v611
    %v676 = vmul.f32 %v612, %v612
    %v677 = vmul.f32 %v613, %v613
    %v678 = vmul.f32 %v614, %v614
    %v679 = vmul.f32 %v615, %v615
    %v680 = vmul.f32 %v616, %v616
    %v681 = vmul.f32 %v617, %v617
    %v682 = vmul.f32 %v618, %v618
    %v683 = vmul.f32 %v619, %v619
    %v684 = vmul.f32 %v620, %v620
    %v685 = vmul.f32 %v621, %v621
    %v686 = vmul.f32 %v622, %v622
    %v687 = vmul.f32 %v623, %v623
    %v688 = vmul.f32 %v624, %v624
    %v689 = vmul.f32 %v625, %v625
    %v690 = vpack.c.bf16 %v630, %v626
    %v691 = vpack.c.bf16 %v631, %v627
    %v692 = vpack.c.bf16 %v632, %v628
    %v693 = vpack.c.bf16 %v633, %v629
    %v694 = vpack.c.bf16 %v638, %v634
    %v695 = vpack.c.bf16 %v639, %v635
    %v696 = vpack.c.bf16 %v640, %v636
    %v697 = vpack.c.bf16 %v641, %v637
    %v698 = vpack.c.bf16 %v646, %v642
    %v699 = vpack.c.bf16 %v647, %v643
    %v700 = vpack.c.bf16 %v648, %v644
    %v701 = vpack.c.bf16 %v649, %v645
    %v702 = vpack.c.bf16 %v654, %v650
    %v703 = vpack.c.bf16 %v655, %v651
    %v704 = vpack.c.bf16 %v656, %v652
    %v705 = vpack.c.bf16 %v657, %v653
    %v706 = vpack.c.bf16 %v662, %v658
    %v707 = vpack.c.bf16 %v663, %v659
    %v708 = vpack.c.bf16 %v664, %v660
    %v709 = vpack.c.bf16 %v665, %v661
    %v710 = vpack.c.bf16 %v670, %v666
    %v711 = vpack.c.bf16 %v671, %v667
    %v712 = vpack.c.bf16 %v672, %v668
    %v713 = vpack.c.bf16 %v673, %v669
    %v714 = vpack.c.bf16 %v678, %v674
    %v715 = vpack.c.bf16 %v679, %v675
    %v716 = vpack.c.bf16 %v680, %v676
    %v717 = vpack.c.bf16 %v681, %v677
    %v718 = vpack.c.bf16 %v686, %v682
    %v719 = vpack.c.bf16 %v687, %v683
    %v720 = vpack.c.bf16 %v688, %v684
    %v721 = vpack.c.bf16 %v689, %v685
    %v722 = vld [vmem:[#allocation8] sm:$0xf]
    %v723 = vld [vmem:[#allocation8 + $0x4] sm:$0xf]
    %v724 = vld [vmem:[#allocation8 + $0x8] sm:$0xf]
    %v725 = vld [vmem:[#allocation8 + $0xc] sm:$0xf]
    %v726 = vld [vmem:[#allocation8 + $0x10] sm:$0xf]
    %v727 = vld [vmem:[#allocation8 + $0x14] sm:$0xf]
    %v728 = vld [vmem:[#allocation8 + $0x18] sm:$0xf]
    %v729 = vld [vmem:[#allocation8 + $0x1c] sm:$0xf]
    %v730 = vld [vmem:[#allocation8 + $0x20] sm:$0xf]
    %v731 = vld [vmem:[#allocation8 + $0x24] sm:$0xf]
    %v732 = vld [vmem:[#allocation8 + $0x28] sm:$0xf]
    %v733 = vld [vmem:[#allocation8 + $0x2c] sm:$0xf]
    %v734 = vld [vmem:[#allocation8 + $0x30] sm:$0xf]
    %v735 = vld [vmem:[#allocation8 + $0x34] sm:$0xf]
    %v736 = vld [vmem:[#allocation8 + $0x38] sm:$0xf]
    %v737 = vld [vmem:[#allocation8 + $0x3c] sm:$0xf]
    %v738 = vld [vmem:[#allocation8 + $0x40] sm:$0xf]
    %v739 = vld [vmem:[#allocation8 + $0x44] sm:$0xf]
    %v740 = vld [vmem:[#allocation8 + $0x48] sm:$0xf]
    %v741 = vld [vmem:[#allocation8 + $0x4c] sm:$0xf]
    %v742 = vld [vmem:[#allocation8 + $0x50] sm:$0xf]
    %v743 = vld [vmem:[#allocation8 + $0x54] sm:$0xf]
    %v744 = vld [vmem:[#allocation8 + $0x58] sm:$0xf]
    %v745 = vld [vmem:[#allocation8 + $0x5c] sm:$0xf]
    %v746 = vld [vmem:[#allocation8 + $0x60] sm:$0xf]
    %v747 = vld [vmem:[#allocation8 + $0x64] sm:$0xf]
    %v748 = vld [vmem:[#allocation8 + $0x68] sm:$0xf]
    %v749 = vld [vmem:[#allocation8 + $0x6c] sm:$0xf]
    %v750 = vld [vmem:[#allocation8 + $0x70] sm:$0xf]
    %v751 = vld [vmem:[#allocation8 + $0x74] sm:$0xf]
    %v752 = vld [vmem:[#allocation8 + $0x78] sm:$0xf]
    %v753 = vld [vmem:[#allocation8 + $0x7c] sm:$0xf]
    %v754 = vld [vmem:[#allocation8 + $0x80] sm:$0xf]
    %v755 = vld [vmem:[#allocation8 + $0x84] sm:$0xf]
    %v756 = vld [vmem:[#allocation8 + $0x88] sm:$0xf]
    %v757 = vld [vmem:[#allocation8 + $0x8c] sm:$0xf]
    %v758 = vld [vmem:[#allocation8 + $0x90] sm:$0xf]
    %v759 = vld [vmem:[#allocation8 + $0x94] sm:$0xf]
    %v760 = vld [vmem:[#allocation8 + $0x98] sm:$0xf]
    %v761 = vld [vmem:[#allocation8 + $0x9c] sm:$0xf]
    %v762 = vld [vmem:[#allocation8 + $0xa0] sm:$0xf]
    %v763 = vld [vmem:[#allocation8 + $0xa4] sm:$0xf]
    %v764 = vld [vmem:[#allocation8 + $0xa8] sm:$0xf]
    %v765 = vld [vmem:[#allocation8 + $0xac] sm:$0xf]
    %v766 = vld [vmem:[#allocation8 + $0xb0] sm:$0xf]
    %v767 = vld [vmem:[#allocation8 + $0xb4] sm:$0xf]
    %v768 = vld [vmem:[#allocation8 + $0xb8] sm:$0xf]
    %v769 = vld [vmem:[#allocation8 + $0xbc] sm:$0xf]
    %v770 = vld [vmem:[#allocation8 + $0xc0] sm:$0xf]
    %v771 = vld [vmem:[#allocation8 + $0xc4] sm:$0xf]
    %v772 = vld [vmem:[#allocation8 + $0xc8] sm:$0xf]
    %v773 = vld [vmem:[#allocation8 + $0xcc] sm:$0xf]
    %v774 = vld [vmem:[#allocation8 + $0xd0] sm:$0xf]
    %v775 = vld [vmem:[#allocation8 + $0xd4] sm:$0xf]
    %v776 = vld [vmem:[#allocation8 + $0xd8] sm:$0xf]
    %v777 = vld [vmem:[#allocation8 + $0xdc] sm:$0xf]
    %v778 = vld [vmem:[#allocation8 + $0xe0] sm:$0xf]
    %v779 = vld [vmem:[#allocation8 + $0xe4] sm:$0xf]
    %v780 = vld [vmem:[#allocation8 + $0xe8] sm:$0xf]
    %v781 = vld [vmem:[#allocation8 + $0xec] sm:$0xf]
    %v782 = vld [vmem:[#allocation8 + $0xf0] sm:$0xf]
    %v783 = vld [vmem:[#allocation8 + $0xf4] sm:$0xf]
    %v784 = vld [vmem:[#allocation8 + $0xf8] sm:$0xf]
    %v785 = vld [vmem:[#allocation8 + $0xfc] sm:$0xf]
    %v850 = vunpack.c.l.b16 %v722
    %v851 = vunpack.c.l.b16 %v723
    %v852 = vunpack.c.l.b16 %v724
    %v853 = vunpack.c.l.b16 %v725
    %v854 = vunpack.c.l.b16 %v726
    %v855 = vunpack.c.l.b16 %v727
    %v856 = vunpack.c.l.b16 %v728
    %v857 = vunpack.c.l.b16 %v729
    %v858 = vunpack.c.l.b16 %v730
    %v859 = vunpack.c.l.b16 %v731
    %v860 = vunpack.c.l.b16 %v732
    %v861 = vunpack.c.l.b16 %v733
    %v862 = vunpack.c.l.b16 %v734
    %v863 = vunpack.c.l.b16 %v735
    %v864 = vunpack.c.l.b16 %v736
    %v865 = vunpack.c.l.b16 %v737
    %v866 = vunpack.c.l.b16 %v738
    %v867 = vunpack.c.l.b16 %v739
    %v868 = vunpack.c.l.b16 %v740
    %v869 = vunpack.c.l.b16 %v741
    %v870 = vunpack.c.l.b16 %v742
    %v871 = vunpack.c.l.b16 %v743
    %v872 = vunpack.c.l.b16 %v744
    %v873 = vunpack.c.l.b16 %v745
    %v874 = vunpack.c.l.b16 %v746
    %v875 = vunpack.c.l.b16 %v747
    %v876 = vunpack.c.l.b16 %v748
    %v877 = vunpack.c.l.b16 %v749
    %v878 = vunpack.c.l.b16 %v750
    %v879 = vunpack.c.l.b16 %v751
    %v880 = vunpack.c.l.b16 %v752
    %v881 = vunpack.c.l.b16 %v753
    %v882 = vunpack.c.l.b16 %v754
    %v883 = vunpack.c.l.b16 %v755
    %v884 = vunpack.c.l.b16 %v756
    %v885 = vunpack.c.l.b16 %v757
    %v886 = vunpack.c.l.b16 %v758
    %v887 = vunpack.c.l.b16 %v759
    %v888 = vunpack.c.l.b16 %v760
    %v889 = vunpack.c.l.b16 %v761
    %v890 = vunpack.c.l.b16 %v762
    %v891 = vunpack.c.l.b16 %v763
    %v892 = vunpack.c.l.b16 %v764
    %v893 = vunpack.c.l.b16 %v765
    %v894 = vunpack.c.l.b16 %v766
    %v895 = vunpack.c.l.b16 %v767
    %v896 = vunpack.c.l.b16 %v768
    %v897 = vunpack.c.l.b16 %v769
    %v898 = vunpack.c.l.b16 %v770
    %v899 = vunpack.c.l.b16 %v771
    %v900 = vunpack.c.l.b16 %v772
    %v901 = vunpack.c.l.b16 %v773
    %v902 = vunpack.c.l.b16 %v774
    %v903 = vunpack.c.l.b16 %v775
    %v904 = vunpack.c.l.b16 %v776
    %v905 = vunpack.c.l.b16 %v777
    %v906 = vunpack.c.l.b16 %v778
    %v907 = vunpack.c.l.b16 %v779
    %v908 = vunpack.c.l.b16 %v780
    %v909 = vunpack.c.l.b16 %v781
    %v910 = vunpack.c.l.b16 %v782
    %v911 = vunpack.c.l.b16 %v783
    %v912 = vunpack.c.l.b16 %v784
    %v913 = vunpack.c.l.b16 %v785
    %v914 = vpack.c.b16 %v851, %v850
    %v915 = vpack.c.b16 %v853, %v852
    %v916 = vpack.c.b16 %v855, %v854
    %v917 = vpack.c.b16 %v857, %v856
    %v918 = vpack.c.b16 %v859, %v858
    %v919 = vpack.c.b16 %v861, %v860
    %v920 = vpack.c.b16 %v863, %v862
    %v921 = vpack.c.b16 %v865, %v864
    %v922 = vpack.c.b16 %v867, %v866
    %v923 = vpack.c.b16 %v869, %v868
    %v924 = vpack.c.b16 %v871, %v870
    %v925 = vpack.c.b16 %v873, %v872
    %v926 = vpack.c.b16 %v875, %v874
    %v927 = vpack.c.b16 %v877, %v876
    %v928 = vpack.c.b16 %v879, %v878
    %v929 = vpack.c.b16 %v881, %v880
    %v930 = vpack.c.b16 %v883, %v882
    %v931 = vpack.c.b16 %v885, %v884
    %v932 = vpack.c.b16 %v887, %v886
    %v933 = vpack.c.b16 %v889, %v888
    %v934 = vpack.c.b16 %v891, %v890
    %v935 = vpack.c.b16 %v893, %v892
    %v936 = vpack.c.b16 %v895, %v894
    %v937 = vpack.c.b16 %v897, %v896
    %v938 = vpack.c.b16 %v899, %v898
    %v939 = vpack.c.b16 %v901, %v900
    %v940 = vpack.c.b16 %v903, %v902
    %v941 = vpack.c.b16 %v905, %v904
    %v942 = vpack.c.b16 %v907, %v906
    %v943 = vpack.c.b16 %v909, %v908
    %v944 = vpack.c.b16 %v911, %v910
    %v945 = vpack.c.b16 %v913, %v912
    %978 = vmatprep.subr.bf16.mxu0 0
    %979 = vmatpush1.bf16.msra.mxu0 %v914
    %980 = vmatprep.subr.bf16.mxu0 0
    %981 = vmatpush1.bf16.msra.mxu0 %v915
    %982 = vmatprep.subr.bf16.mxu0 0
    %983 = vmatpush1.bf16.msra.mxu0 %v916
    %984 = vmatprep.subr.bf16.mxu0 0
    %985 = vmatpush1.bf16.msra.mxu0 %v917
    %986 = vmatprep.subr.bf16.mxu0 0
    %987 = vmatpush1.bf16.msra.mxu0 %v918
    %988 = vmatprep.subr.bf16.mxu0 0
    %989 = vmatpush1.bf16.msra.mxu0 %v919
    %990 = vmatprep.subr.bf16.mxu0 0
    %991 = vmatpush1.bf16.msra.mxu0 %v920
    %992 = vmatprep.subr.bf16.mxu0 0
    %993 = vmatpush1.bf16.msra.mxu0 %v921
    %994 = vmatprep.subr.bf16.mxu0 0
    %995 = vmatpush1.bf16.msra.mxu0 %v922
    %996 = vmatprep.subr.bf16.mxu0 0
    %997 = vmatpush1.bf16.msra.mxu0 %v923
    %998 = vmatprep.subr.bf16.mxu0 0
    %999 = vmatpush1.bf16.msra.mxu0 %v924
    %1000 = vmatprep.subr.bf16.mxu0 0
    %1001 = vmatpush1.bf16.msra.mxu0 %v925
    %1002 = vmatprep.subr.bf16.mxu0 0
    %1003 = vmatpush1.bf16.msra.mxu0 %v926
    %1004 = vmatprep.subr.bf16.mxu0 0
    %1005 = vmatpush1.bf16.msra.mxu0 %v927
    %1006 = vmatprep.subr.bf16.mxu0 0
    %1007 = vmatpush1.bf16.msra.mxu0 %v928
    %1008 = vmatprep.subr.bf16.mxu0 0
    %1009 = vmatpush1.bf16.msra.mxu0 %v929
    %1010 = vmatprep.mubr.bf16.mxu0 %v691
    %1011 = vmatmul.mubr.bf16.gmra.mrb[0].mxu0 %v690
    %v1012 = vpop.f32.mrb[0].mxu0
    %v1013 = vadd.f32 0.0, %v1012
    %v1014 = vpop.f32.mrb[0].mxu0
    %v1015 = vpop.f32.mrb[0].mxu0
    %v1016 = vadd.f32 0.0, %v1015
    %v1017 = vpop.f32.mrb[0].mxu0
    %1018 = vmatprep.mubr.bf16.mxu0 %v695
    %1019 = vmatmul.mubr.bf16.gmra.mrb[0].mxu0 %v694
    %v1020 = vpop.f32.mrb[0].mxu0
    %v1021 = vadd.f32 0.0, %v1020
    %v1022 = vpop.f32.mrb[0].mxu0
    %v1023 = vpop.f32.mrb[0].mxu0
    %v1024 = vadd.f32 0.0, %v1023
    %v1025 = vpop.f32.mrb[0].mxu0
    %1026 = vmatprep.mubr.bf16.mxu0 %v699
    %1027 = vmatmul.mubr.bf16.gmra.mrb[0].mxu0 %v698
    %v1028 = vpop.f32.mrb[0].mxu0
    %v1029 = vadd.f32 0.0, %v1028
    %v1030 = vpop.f32.mrb[0].mxu0
    %v1031 = vpop.f32.mrb[0].mxu0
    %v1032 = vadd.f32 0.0, %v1031
    %v1033 = vpop.f32.mrb[0].mxu0
    %1034 = vmatprep.mubr.bf16.mxu0 %v703
    %1035 = vmatmul.mubr.bf16.gmra.mrb[0].mxu0 %v702
    %v1036 = vpop.f32.mrb[0].mxu0
    %v1037 = vadd.f32 0.0, %v1036
    %v1038 = vpop.f32.mrb[0].mxu0
    %v1039 = vpop.f32.mrb[0].mxu0
    %v1040 = vadd.f32 0.0, %v1039
    %v1041 = vpop.f32.mrb[0].mxu0
    %1042 = vmatprep.mubr.bf16.mxu0 %v707
    %1043 = vmatmul.mubr.bf16.gmra.mrb[0].mxu0 %v706
    %v1044 = vpop.f32.mrb[0].mxu0
    %v1045 = vadd.f32 0.0, %v1044
    %v1046 = vpop.f32.mrb[0].mxu0
    %v1047 = vpop.f32.mrb[0].mxu0
    %v1048 = vadd.f32 0.0, %v1047
    %v1049 = vpop.f32.mrb[0].mxu0
    %1050 = vmatprep.mubr.bf16.mxu0 %v711
    %1051 = vmatmul.mubr.bf16.gmra.mrb[0].mxu0 %v710
    %v1052 = vpop.f32.mrb[0].mxu0
    %v1053 = vadd.f32 0.0, %v1052
    %v1054 = vpop.f32.mrb[0].mxu0
    %v1055 = vpop.f32.mrb[0].mxu0
    %v1056 = vadd.f32 0.0, %v1055
    %v1057 = vpop.f32.mrb[0].mxu0
    %1058 = vmatprep.mubr.bf16.mxu0 %v715
    %1059 = vmatmul.mubr.bf16.gmra.mrb[0].mxu0 %v714
    %v1060 = vpop.f32.mrb[0].mxu0
    %v1061 = vadd.f32 0.0, %v1060
    %v1062 = vpop.f32.mrb[0].mxu0
    %v1063 = vpop.f32.mrb[0].mxu0
    %v1064 = vadd.f32 0.0, %v1063
    %v1065 = vpop.f32.mrb[0].mxu0
    %1066 = vmatprep.mubr.bf16.mxu0 %v719
    %1067 = vmatmul.mubr.bf16.gmra.mrb[0].mxu0 %v718
    %v1068 = vpop.f32.mrb[0].mxu0
    %v1069 = vadd.f32 0.0, %v1068
    %v1070 = vpop.f32.mrb[0].mxu0
    %v1071 = vpop.f32.mrb[0].mxu0
    %v1072 = vadd.f32 0.0, %v1071
    %v1073 = vpop.f32.mrb[0].mxu0
    %1074 = vdwg.mxu0
    %1075 = vmatprep.subr.bf16.mxu0 0
    %1076 = vmatpush1.bf16.msra.mxu0 %v930
    %1077 = vmatprep.subr.bf16.mxu0 0
    %1078 = vmatpush1.bf16.msra.mxu0 %v931
    %1079 = vmatprep.subr.bf16.mxu0 0
    %1080 = vmatpush1.bf16.msra.mxu0 %v932
    %1081 = vmatprep.subr.bf16.mxu0 0
    %1082 = vmatpush1.bf16.msra.mxu0 %v933
    %1083 = vmatprep.subr.bf16.mxu0 0
    %1084 = vmatpush1.bf16.msra.mxu0 %v934
    %1085 = vmatprep.subr.bf16.mxu0 0
    %1086 = vmatpush1.bf16.msra.mxu0 %v935
    %1087 = vmatprep.subr.bf16.mxu0 0
    %1088 = vmatpush1.bf16.msra.mxu0 %v936
    %1089 = vmatprep.subr.bf16.mxu0 0
    %1090 = vmatpush1.bf16.msra.mxu0 %v937
    %1091 = vmatprep.subr.bf16.mxu0 0
    %1092 = vmatpush1.bf16.msra.mxu0 %v938
    %1093 = vmatprep.subr.bf16.mxu0 0
    %1094 = vmatpush1.bf16.msra.mxu0 %v939
    %1095 = vmatprep.subr.bf16.mxu0 0
    %1096 = vmatpush1.bf16.msra.mxu0 %v940
    %1097 = vmatprep.subr.bf16.mxu0 0
    %1098 = vmatpush1.bf16.msra.mxu0 %v941
    %1099 = vmatprep.subr.bf16.mxu0 0
    %1100 = vmatpush1.bf16.msra.mxu0 %v942
    %1101 = vmatprep.subr.bf16.mxu0 0
    %1102 = vmatpush1.bf16.msra.mxu0 %v943
    %1103 = vmatprep.subr.bf16.mxu0 0
    %1104 = vmatpush1.bf16.msra.mxu0 %v944
    %1105 = vmatprep.subr.bf16.mxu0 0
    %1106 = vmatpush1.bf16.msra.mxu0 %v945
    %1107 = vmatprep.mubr.bf16.mxu0 %v693
    %1108 = vmatmul.mubr.bf16.gmra.mrb[0].mxu0 %v692
    %v1109 = vpop.f32.mrb[0].mxu0
    %v1110 = vadd.f32 %v1013, %v1109
    %v1111 = vpop.f32.mrb[0].mxu0
    %v1112 = vpop.f32.mrb[0].mxu0
    %v1113 = vadd.f32 %v1016, %v1112
    %v1114 = vpop.f32.mrb[0].mxu0
    %1115 = vmatprep.mubr.bf16.mxu0 %v697
    %1116 = vmatmul.mubr.bf16.gmra.mrb[0].mxu0 %v696
    %v1117 = vpop.f32.mrb[0].mxu0
    %v1118 = vadd.f32 %v1021, %v1117
    %v1119 = vpop.f32.mrb[0].mxu0
    %v1120 = vpop.f32.mrb[0].mxu0
    %v1121 = vadd.f32 %v1024, %v1120
    %v1122 = vpop.f32.mrb[0].mxu0
    %1123 = vmatprep.mubr.bf16.mxu0 %v701
    %1124 = vmatmul.mubr.bf16.gmra.mrb[0].mxu0 %v700
    %v1125 = vpop.f32.mrb[0].mxu0
    %v1126 = vadd.f32 %v1029, %v1125
    %v1127 = vpop.f32.mrb[0].mxu0
    %v1128 = vpop.f32.mrb[0].mxu0
    %v1129 = vadd.f32 %v1032, %v1128
    %v1130 = vpop.f32.mrb[0].mxu0
    %1131 = vmatprep.mubr.bf16.mxu0 %v705
    %1132 = vmatmul.mubr.bf16.gmra.mrb[0].mxu0 %v704
    %v1133 = vpop.f32.mrb[0].mxu0
    %v1134 = vadd.f32 %v1037, %v1133
    %v1135 = vpop.f32.mrb[0].mxu0
    %v1136 = vpop.f32.mrb[0].mxu0
    %v1137 = vadd.f32 %v1040, %v1136
    %v1138 = vpop.f32.mrb[0].mxu0
    %1139 = vmatprep.mubr.bf16.mxu0 %v709
    %1140 = vmatmul.mubr.bf16.gmra.mrb[0].mxu0 %v708
    %v1141 = vpop.f32.mrb[0].mxu0
    %v1142 = vadd.f32 %v1045, %v1141
    %v1143 = vpop.f32.mrb[0].mxu0
    %v1144 = vpop.f32.mrb[0].mxu0
    %v1145 = vadd.f32 %v1048, %v1144
    %v1146 = vpop.f32.mrb[0].mxu0
    %1147 = vmatprep.mubr.bf16.mxu0 %v713
    %1148 = vmatmul.mubr.bf16.gmra.mrb[0].mxu0 %v712
    %v1149 = vpop.f32.mrb[0].mxu0
    %v1150 = vadd.f32 %v1053, %v1149
    %v1151 = vpop.f32.mrb[0].mxu0
    %v1152 = vpop.f32.mrb[0].mxu0
    %v1153 = vadd.f32 %v1056, %v1152
    %v1154 = vpop.f32.mrb[0].mxu0
    %1155 = vmatprep.mubr.bf16.mxu0 %v717
    %1156 = vmatmul.mubr.bf16.gmra.mrb[0].mxu0 %v716
    %v1157 = vpop.f32.mrb[0].mxu0
    %v1158 = vadd.f32 %v1061, %v1157
    %v1159 = vpop.f32.mrb[0].mxu0
    %v1160 = vpop.f32.mrb[0].mxu0
    %v1161 = vadd.f32 %v1064, %v1160
    %v1162 = vpop.f32.mrb[0].mxu0
    %1163 = vmatprep.mubr.bf16.mxu0 %v721
    %1164 = vmatmul.mubr.bf16.gmra.mrb[0].mxu0 %v720
    %v1165 = vpop.f32.mrb[0].mxu0
    %v1166 = vadd.f32 %v1069, %v1165
    %v1167 = vpop.f32.mrb[0].mxu0
    %v1168 = vpop.f32.mrb[0].mxu0
    %v1169 = vadd.f32 %v1072, %v1168
    %v1170 = vpop.f32.mrb[0].mxu0
    %1171 = vdwg.mxu0
    %v1172 = vld [vmem:[#allocation7] sm:$0xf]
    %v1173 = vld [vmem:[#allocation7 + $0x4] sm:$0xf]
    %v1174 = vld [vmem:[#allocation7 + $0x8] sm:$0xf]
    %v1175 = vld [vmem:[#allocation7 + $0xc] sm:$0xf]
    %v1176 = vld [vmem:[#allocation7 + $0x10] sm:$0xf]
    %v1177 = vld [vmem:[#allocation7 + $0x14] sm:$0xf]
    %v1178 = vld [vmem:[#allocation7 + $0x18] sm:$0xf]
    %v1179 = vld [vmem:[#allocation7 + $0x1c] sm:$0xf]
    %v1180 = vld [vmem:[#allocation7 + $0x20] sm:$0xf]
    %v1181 = vld [vmem:[#allocation7 + $0x24] sm:$0xf]
    %v1182 = vld [vmem:[#allocation7 + $0x28] sm:$0xf]
    %v1183 = vld [vmem:[#allocation7 + $0x2c] sm:$0xf]
    %v1184 = vld [vmem:[#allocation7 + $0x30] sm:$0xf]
    %v1185 = vld [vmem:[#allocation7 + $0x34] sm:$0xf]
    %v1186 = vld [vmem:[#allocation7 + $0x38] sm:$0xf]
    %v1187 = vld [vmem:[#allocation7 + $0x3c] sm:$0xf]
    %v1204 = vunpack.c.l.b16 %v1172
    %v1205 = vunpack.c.l.b16 %v1173
    %v1206 = vunpack.c.l.b16 %v1174
    %v1207 = vunpack.c.l.b16 %v1175
    %v1208 = vunpack.c.l.b16 %v1176
    %v1209 = vunpack.c.l.b16 %v1177
    %v1210 = vunpack.c.l.b16 %v1178
    %v1211 = vunpack.c.l.b16 %v1179
    %v1212 = vunpack.c.l.b16 %v1180
    %v1213 = vunpack.c.l.b16 %v1181
    %v1214 = vunpack.c.l.b16 %v1182
    %v1215 = vunpack.c.l.b16 %v1183
    %v1216 = vunpack.c.l.b16 %v1184
    %v1217 = vunpack.c.l.b16 %v1185
    %v1218 = vunpack.c.l.b16 %v1186
    %v1219 = vunpack.c.l.b16 %v1187
    %v1220 = vpack.c.b16 %v1205, %v1204
    %v1221 = vpack.c.b16 %v1207, %v1206
    %v1222 = vpack.c.b16 %v1209, %v1208
    %v1223 = vpack.c.b16 %v1211, %v1210
    %v1224 = vpack.c.b16 %v1213, %v1212
    %v1225 = vpack.c.b16 %v1215, %v1214
    %v1226 = vpack.c.b16 %v1217, %v1216
    %v1227 = vpack.c.b16 %v1219, %v1218
    %1236 = vmatprep.subr.bf16.mxu0 0
    %1237 = vmatpush1.bf16.msra.mxu0 %v1220
    %1238 = vmatprep.subr.bf16.mxu0 0
    %1239 = vmatpush1.bf16.msra.mxu0 %v1221
    %1240 = vmatprep.subr.bf16.mxu0 0
    %1241 = vmatpush1.bf16.msra.mxu0 %v1222
    %1242 = vmatprep.subr.bf16.mxu0 0
    %1243 = vmatpush1.bf16.msra.mxu0 %v1223
    %1244 = vmatprep.subr.bf16.mxu0 0
    %1245 = vmatpush1.bf16.msra.mxu0 %v1224
    %1246 = vmatprep.subr.bf16.mxu0 0
    %1247 = vmatpush1.bf16.msra.mxu0 %v1225
    %1248 = vmatprep.subr.bf16.mxu0 0
    %1249 = vmatpush1.bf16.msra.mxu0 %v1226
    %1250 = vmatprep.subr.bf16.mxu0 0
    %1251 = vmatpush1.bf16.msra.mxu0 %v1227
    %1252 = vmatprep.subr.bf16.mxu0 0
    %1253 = vmatpush1.bf16.msra.mxu0 0
    %1254 = vmatprep.subr.bf16.mxu0 0
    %1255 = vmatpush1.bf16.msra.mxu0 0
    %1256 = vmatprep.subr.bf16.mxu0 0
    %1257 = vmatpush1.bf16.msra.mxu0 0
    %1258 = vmatprep.subr.bf16.mxu0 0
    %1259 = vmatpush1.bf16.msra.mxu0 0
    %1260 = vmatprep.subr.bf16.mxu0 0
    %1261 = vmatpush1.bf16.msra.mxu0 0
    %1262 = vmatprep.subr.bf16.mxu0 0
    %1263 = vmatpush1.bf16.msra.mxu0 0
    %1264 = vmatprep.subr.bf16.mxu0 0
    %1265 = vmatpush1.bf16.msra.mxu0 0
    %1266 = vmatprep.subr.bf16.mxu0 0
    %1267 = vmatpush1.bf16.msra.mxu0 0
    %1268 = vmatprep.mubr.bf16.mxu0 0
    %1269 = vmatmul.mubr.bf16.gmra.mrb[0].mxu0 %v160
    %v1270 = vpop.f32.mrb[0].mxu0
    %v1271 = vadd.f32 0.0, %v1270
    %v1272 = vpop.f32.mrb[0].mxu0
    %v1273 = vpop.f32.mrb[0].mxu0
    %v1274 = vadd.f32 0.0, %v1273
    %v1275 = vpop.f32.mrb[0].mxu0
    %1276 = vmatprep.mubr.bf16.mxu0 0
    %1277 = vmatmul.mubr.bf16.gmra.mrb[0].mxu0 %v161
    %v1278 = vpop.f32.mrb[0].mxu0
    %v1279 = vadd.f32 0.0, %v1278
    %v1280 = vpop.f32.mrb[0].mxu0
    %v1281 = vpop.f32.mrb[0].mxu0
    %v1282 = vadd.f32 0.0, %v1281
    %v1283 = vpop.f32.mrb[0].mxu0
    %1284 = vmatprep.mubr.bf16.mxu0 0
    %1285 = vmatmul.mubr.bf16.gmra.mrb[0].mxu0 %v162
    %v1286 = vpop.f32.mrb[0].mxu0
    %v1287 = vadd.f32 0.0, %v1286
    %v1288 = vpop.f32.mrb[0].mxu0
    %v1289 = vpop.f32.mrb[0].mxu0
    %v1290 = vadd.f32 0.0, %v1289
    %v1291 = vpop.f32.mrb[0].mxu0
    %1292 = vmatprep.mubr.bf16.mxu0 0
    %1293 = vmatmul.mubr.bf16.gmra.mrb[0].mxu0 %v163
    %v1294 = vpop.f32.mrb[0].mxu0
    %v1295 = vadd.f32 0.0, %v1294
    %v1296 = vpop.f32.mrb[0].mxu0
    %v1297 = vpop.f32.mrb[0].mxu0
    %v1298 = vadd.f32 0.0, %v1297
    %v1299 = vpop.f32.mrb[0].mxu0
    %1300 = vmatprep.mubr.bf16.mxu0 0
    %1301 = vmatmul.mubr.bf16.gmra.mrb[0].mxu0 %v164
    %v1302 = vpop.f32.mrb[0].mxu0
    %v1303 = vadd.f32 0.0, %v1302
    %v1304 = vpop.f32.mrb[0].mxu0
    %v1305 = vpop.f32.mrb[0].mxu0
    %v1306 = vadd.f32 0.0, %v1305
    %v1307 = vpop.f32.mrb[0].mxu0
    %1308 = vmatprep.mubr.bf16.mxu0 0
    %1309 = vmatmul.mubr.bf16.gmra.mrb[0].mxu0 %v165
    %v1310 = vpop.f32.mrb[0].mxu0
    %v1311 = vadd.f32 0.0, %v1310
    %v1312 = vpop.f32.mrb[0].mxu0
    %v1313 = vpop.f32.mrb[0].mxu0
    %v1314 = vadd.f32 0.0, %v1313
    %v1315 = vpop.f32.mrb[0].mxu0
    %1316 = vmatprep.mubr.bf16.mxu0 0
    %1317 = vmatmul.mubr.bf16.gmra.mrb[0].mxu0 %v166
    %v1318 = vpop.f32.mrb[0].mxu0
    %v1319 = vadd.f32 0.0, %v1318
    %v1320 = vpop.f32.mrb[0].mxu0
    %v1321 = vpop.f32.mrb[0].mxu0
    %v1322 = vadd.f32 0.0, %v1321
    %v1323 = vpop.f32.mrb[0].mxu0
    %1324 = vmatprep.mubr.bf16.mxu0 0
    %1325 = vmatmul.mubr.bf16.gmra.mrb[0].mxu0 %v167
    %v1326 = vpop.f32.mrb[0].mxu0
    %v1327 = vadd.f32 0.0, %v1326
    %v1328 = vpop.f32.mrb[0].mxu0
    %v1329 = vpop.f32.mrb[0].mxu0
    %v1330 = vadd.f32 0.0, %v1329
    %v1331 = vpop.f32.mrb[0].mxu0
    %1332 = vdwg.mxu0
    %v1333 = vxor.u32 %v1271, 2147483648
    %v1334 = vxor.u32 %v1274, 2147483648
    %v1335 = vxor.u32 %v1279, 2147483648
    %v1336 = vxor.u32 %v1282, 2147483648
    %v1337 = vxor.u32 %v1287, 2147483648
    %v1338 = vxor.u32 %v1290, 2147483648
    %v1339 = vxor.u32 %v1295, 2147483648
    %v1340 = vxor.u32 %v1298, 2147483648
    %v1341 = vxor.u32 %v1303, 2147483648
    %v1342 = vxor.u32 %v1306, 2147483648
    %v1343 = vxor.u32 %v1311, 2147483648
    %v1344 = vxor.u32 %v1314, 2147483648
    %v1345 = vxor.u32 %v1319, 2147483648
    %v1346 = vxor.u32 %v1322, 2147483648
    %v1347 = vxor.u32 %v1327, 2147483648
    %v1348 = vxor.u32 %v1330, 2147483648
    %v1349 = vmul.f32 %v1333, 1.442695
    %v1350 = vpow.pop %v1349
    %v1351 = vmul.f32 %v1334, 1.442695
    %v1352 = vpow.pop %v1351
    %v1353 = vmul.f32 %v1335, 1.442695
    %v1354 = vpow.pop %v1353
    %v1355 = vmul.f32 %v1336, 1.442695
    %v1356 = vpow.pop %v1355
    %v1357 = vmul.f32 %v1337, 1.442695
    %v1358 = vpow.pop %v1357
    %v1359 = vmul.f32 %v1338, 1.442695
    %v1360 = vpow.pop %v1359
    %v1361 = vmul.f32 %v1339, 1.442695
    %v1362 = vpow.pop %v1361
    %v1363 = vmul.f32 %v1340, 1.442695
    %v1364 = vpow.pop %v1363
    %v1365 = vmul.f32 %v1341, 1.442695
    %v1366 = vpow.pop %v1365
    %v1367 = vmul.f32 %v1342, 1.442695
    %v1368 = vpow.pop %v1367
    %v1369 = vmul.f32 %v1343, 1.442695
    %v1370 = vpow.pop %v1369
    %v1371 = vmul.f32 %v1344, 1.442695
    %v1372 = vpow.pop %v1371
    %v1373 = vmul.f32 %v1345, 1.442695
    %v1374 = vpow.pop %v1373
    %v1375 = vmul.f32 %v1346, 1.442695
    %v1376 = vpow.pop %v1375
    %v1377 = vmul.f32 %v1347, 1.442695
    %v1378 = vpow.pop %v1377
    %v1379 = vmul.f32 %v1348, 1.442695
    %v1380 = vpow.pop %v1379
    %v1381 = vadd.f32 %v1350, 1.0
    %v1382 = vadd.f32 %v1352, 1.0
    %v1383 = vadd.f32 %v1354, 1.0
    %v1384 = vadd.f32 %v1356, 1.0
    %v1385 = vadd.f32 %v1358, 1.0
    %v1386 = vadd.f32 %v1360, 1.0
    %v1387 = vadd.f32 %v1362, 1.0
    %v1388 = vadd.f32 %v1364, 1.0
    %v1389 = vadd.f32 %v1366, 1.0
    %v1390 = vadd.f32 %v1368, 1.0
    %v1391 = vadd.f32 %v1370, 1.0
    %v1392 = vadd.f32 %v1372, 1.0
    %v1393 = vadd.f32 %v1374, 1.0
    %v1394 = vadd.f32 %v1376, 1.0
    %v1395 = vadd.f32 %v1378, 1.0
    %v1396 = vadd.f32 %v1380, 1.0
    %v1397 = vrcp.pop %v1381
    %v1398 = vmul.f32 1.0, %v1397
    %v1399 = vrcp.pop %v1382
    %v1400 = vmul.f32 1.0, %v1399
    %v1401 = vrcp.pop %v1383
    %v1402 = vmul.f32 1.0, %v1401
    %v1403 = vrcp.pop %v1384
    %v1404 = vmul.f32 1.0, %v1403
    %v1405 = vrcp.pop %v1385
    %v1406 = vmul.f32 1.0, %v1405
    %v1407 = vrcp.pop %v1386
    %v1408 = vmul.f32 1.0, %v1407
    %v1409 = vrcp.pop %v1387
    %v1410 = vmul.f32 1.0, %v1409
    %v1411 = vrcp.pop %v1388
    %v1412 = vmul.f32 1.0, %v1411
    %v1413 = vrcp.pop %v1389
    %v1414 = vmul.f32 1.0, %v1413
    %v1415 = vrcp.pop %v1390
    %v1416 = vmul.f32 1.0, %v1415
    %v1417 = vrcp.pop %v1391
    %v1418 = vmul.f32 1.0, %v1417
    %v1419 = vrcp.pop %v1392
    %v1420 = vmul.f32 1.0, %v1419
    %v1421 = vrcp.pop %v1393
    %v1422 = vmul.f32 1.0, %v1421
    %v1423 = vrcp.pop %v1394
    %v1424 = vmul.f32 1.0, %v1423
    %v1425 = vrcp.pop %v1395
    %v1426 = vmul.f32 1.0, %v1425
    %v1427 = vrcp.pop %v1396
    %v1428 = vmul.f32 1.0, %v1427
    %v1429 = vmul.f32 %v1398, %v1110
    %v1430 = vmul.f32 %v1400, %v1113
    %v1431 = vmul.f32 %v1402, %v1118
    %v1432 = vmul.f32 %v1404, %v1121
    %v1433 = vmul.f32 %v1406, %v1126
    %v1434 = vmul.f32 %v1408, %v1129
    %v1435 = vmul.f32 %v1410, %v1134
    %v1436 = vmul.f32 %v1412, %v1137
    %v1437 = vmul.f32 %v1414, %v1142
    %v1438 = vmul.f32 %v1416, %v1145
    %v1439 = vmul.f32 %v1418, %v1150
    %v1440 = vmul.f32 %v1420, %v1153
    %v1441 = vmul.f32 %v1422, %v1158
    %v1442 = vmul.f32 %v1424, %v1161
    %v1443 = vmul.f32 %v1426, %v1166
    %v1444 = vmul.f32 %v1428, %v1169
    %1445 = vst [vmem:[#allocation10] sm:$0xff] %v1429
    %1446 = vst [vmem:[#allocation10 + $0x8] sm:$0xff] %v1430
    %1447 = vst [vmem:[#allocation10 + $0x10] sm:$0xff] %v1431
    %1448 = vst [vmem:[#allocation10 + $0x18] sm:$0xff] %v1432
    %1449 = vst [vmem:[#allocation10 + $0x20] sm:$0xff] %v1433
    %1450 = vst [vmem:[#allocation10 + $0x28] sm:$0xff] %v1434
    %1451 = vst [vmem:[#allocation10 + $0x30] sm:$0xff] %v1435
    %1452 = vst [vmem:[#allocation10 + $0x38] sm:$0xff] %v1436
    %1453 = vst [vmem:[#allocation10 + $0x40] sm:$0xff] %v1437
    %1454 = vst [vmem:[#allocation10 + $0x48] sm:$0xff] %v1438
    %1455 = vst [vmem:[#allocation10 + $0x50] sm:$0xff] %v1439
    %1456 = vst [vmem:[#allocation10 + $0x58] sm:$0xff] %v1440
    %1457 = vst [vmem:[#allocation10 + $0x60] sm:$0xff] %v1441
    %1458 = vst [vmem:[#allocation10 + $0x68] sm:$0xff] %v1442
    %1459 = vst [vmem:[#allocation10 + $0x70] sm:$0xff] %v1443
    %1460 = vst [vmem:[#allocation10 + $0x78] sm:$0xff] %v1444
    // Predicated region
    $region42: #{tpu_custom_call.1} parent=1 // pred_check
      _
    $region43: #{tpu_custom_call.1} parent=1 // pred_check_branch
      %1462 = sbr.rel (0) target = $region45
    $region44: #{tpu_custom_call.1} parent=1 // pred_region
      %s1464 = ssub.s32 2048, 2048
      %1465 = vsyncadd [#allocation4], %s1464
      %s1466 = sshll.u32 [#allocation10], 4
      %s1467 = int_to_ptr.vmem [resolvable:$true] %s1466
      %1472 = dma.vmem_to_hbm [thread:$0]  %s1467, 2048, %s6, [#allocation4], 128, 128, 8
    $region45: #{tpu_custom_call.1} parent=1 // pred_fallthru
      _
    // Predicated region
    $region46: #{tpu_custom_call.1} parent=1 // pred_check
      _
    $region47: #{tpu_custom_call.1} parent=1 // pred_check_branch
      %1474 = sbr.rel (0) target = $region49
    $region48: #{tpu_custom_call.1} parent=1 // pred_region
      %1475 = dma.done [#allocation4], 2048
    $region49: #{tpu_custom_call.1} parent=1 // pred_fallthru
      _
    %1476 = vsyncpa [#allocation3], 1
    %1477 = vsyncpa [#allocation6], 1
    %1478 = vsyncpa [#allocation9], 1
    %1479 = vsyncpa [#allocation4], 1

</llo_original>
